<compile_context>
chip_gen: v7x
topology: tpu7x:2x2x1
jax: 0.10.0
libtpu: 0.0.40
codegen_flags: <defaults>
</compile_context>

<pallas_src>
import numpy as np
import jax
import jax.numpy as jnp
from jax.experimental import pallas as pl
from jax.experimental.pallas import tpu as pltpu

# ----- config (mirrors the shapes implied by the module's __init__) -----
VOCAB = 50
EMBED = 32              # config.embedding_dim
HIDDEN = EMBED          # hidden_size = embedding_dim
NUM_CLASSES = 2
ATTN_D1 = 128           # W_s1: 2H -> 128
ATTN_HOPS = 32          # W_s2: 128 -> 32
FC_DIM = 128            # fc_layer: 32*2H -> 128
BATCH = 2
SEQ = 8


# --------------------------------------------------------------------------
# Single fused kernel: BiLSTM -> attention -> (bmm ∘ fc ∘ label, folded)
# --------------------------------------------------------------------------
def fused_kernel(x_ref, wx_ref, b_ref, whh_ref,
                 ws1_ref, bs1_ref, ws2_ref,
                 wfold_ref, bfold_ref, out_ref):
    H, B, S, R, C = HIDDEN, BATCH, SEQ, ATTN_HOPS, NUM_CLASSES
    H2 = 2 * H

    # ---- (1) hoisted input projection for BOTH directions (+ both biases)
    #      in one MXU matmul.  Columns are gate-interleaved
    #      [i_f, i_b, f_f, f_b, g_f, g_b, o_f, o_b]; the last E input columns
    #      hold the time-reversed sequence, so row (s, b) already carries the
    #      backward cell's pre-activation for time S-1-s.
    xp = jnp.dot(x_ref[...], wx_ref[...],
                 preferred_element_type=jnp.float32) + b_ref[...]          # (S*B, 8H)

    whh = whh_ref[...]                                                     # (2H, 8H) block-diag

    # ---- (2) fused bidirectional recurrence, fully unrolled (S = 8): one
    #      dependent (B, 2H) @ (2H, 8H) matmul and 4 activations per step.
    h = jnp.zeros((B, H2), jnp.float32)
    c = jnp.zeros((B, H2), jnp.float32)
    h_steps = []
    for s in range(S):
        g = xp[s * B:(s + 1) * B, :] + jnp.dot(
            h, whh, preferred_element_type=jnp.float32)                    # (B, 8H)
        i = jax.nn.sigmoid(g[:, 0:H2])
        f = jax.nn.sigmoid(g[:, H2:2 * H2])
        gg = jnp.tanh(g[:, 2 * H2:3 * H2])
        o = jax.nn.sigmoid(g[:, 3 * H2:4 * H2])
        c = f * c + i * gg
        h = o * jnp.tanh(c)           # (B, 2H) = [h_fwd(t=s), h_bwd(t=S-1-s)]
        h_steps.append(h)

    # ---- (3) register-resident BiLSTM output, rows ordered (b, s) like the
    #      module's output.permute(1, 0, 2): no per-step VMEM stores, no scratch.
    blocks = [jnp.concatenate([h_steps[s][:, 0:H],
                               h_steps[S - 1 - s][:, H:H2]], axis=-1)      # (B, 2H) @ time s
              for s in range(S)]
    lstm_flat = jnp.concatenate(
        [blocks[s][b:b + 1, :] for b in range(B) for s in range(S)],
        axis=0)                                                            # (B*S, 2H)

    # ---- (4) attention_net: W_s2(tanh(W_s1(lstm_out))) -> softmax over seq.
    #      bs2 is constant along the softmax axis and cancels exactly, so it
    #      is dropped; no broadcast of ws2 is needed.
    s1 = jnp.tanh(jnp.dot(lstm_flat, ws1_ref[...],
                          preferred_element_type=jnp.float32) + bs1_ref[...])   # (B*S, 128)
    scores = jnp.dot(s1, ws2_ref[...],
                     preferred_element_type=jnp.float32).reshape(B, S, R)        # (B, S, R)
    m = jnp.max(scores, axis=1, keepdims=True)
    e = jnp.exp(scores - m)
    attn = e * pl.reciprocal(jnp.sum(e, axis=1, keepdims=True), approx=True)     # (B, S, R)
    attn_flat = attn.reshape(B * S, R)

    # ---- (5) bmm + flatten + fc_layer + label with fc/label pre-folded into
    #      wfold (C, R, 2H):
    #        logits[b, c] = sum_{s,d} lstm[b,s,d] * (attn[b,s,:] @ wfold[c])[d]
    #                       + bfold[c]
    cols = []
    for cc in range(C):
        inner = jnp.dot(attn_flat, wfold_ref[cc],
                        preferred_element_type=jnp.float32)                # (B*S, 2H)
        prod = (lstm_flat * inner).reshape(B, S, H2)                       # (B, S, 2H)
        cols.append(jnp.sum(jnp.sum(prod, axis=2, keepdims=True), axis=1)) # (B, 1)
    out_ref[...] = jnp.concatenate(cols, axis=-1) + bfold_ref[...]         # (B, C)


# --------------------------------------------------------------------------
# One-time re-packing of module parameters for the fused kernel
# --------------------------------------------------------------------------
def prepare_kernel_params(p):
    H = HIDDEN

    def pack_bidir(wf, wb):
        # Block-diagonal packing with gate-interleaved columns
        # [i_f, i_b, f_f, f_b, g_f, g_b, o_f, o_b]; forward rows on top.
        rf, rb = wf.shape[0], wb.shape[0]
        out = jnp.zeros((rf + rb, 8 * H), jnp.float32)
        for g in range(4):
            out = out.at[:rf, (2 * g) * H:(2 * g + 1) * H].set(wf[:, g * H:(g + 1) * H])
            out = out.at[rf:, (2 * g + 1) * H:(2 * g + 2) * H].set(wb[:, g * H:(g + 1) * H])
        return out

    # Exact fold of fc_layer + label (eval mode: no nonlinearity in between).
    w_fold = p['wfc'] @ p['wlab']                                      # (R*2H, C)
    b_fold = p['bfc'] @ p['wlab'] + p['blab']                          # (1, C)
    wfold_c = jnp.transpose(
        w_fold.reshape(ATTN_HOPS, 2 * H, NUM_CLASSES), (2, 0, 1))      # (C, R, 2H)

    return dict(
        embedding=p['embedding'],
        wx_comb=pack_bidir(p['wih_f'], p['wih_b']),                    # (2E, 8H)
        whh_comb=pack_bidir(p['whh_f'], p['whh_b']),                   # (2H, 8H)
        b_comb=pack_bidir(p['b_f'], p['b_b']).sum(axis=0, keepdims=True),   # (1, 8H)
        ws1=p['ws1'], bs1=p['bs1'],
        ws2=p['ws2'],                                                  # (128, R); bs2 dropped
        wfold=wfold_c, bfold=b_fold,
    )


# --------------------------------------------------------------------------
# Forward wrapper (glue: embedding gather + permute + time-reverse concat,
# then exactly one pallas_call)
# --------------------------------------------------------------------------
@jax.jit
def self_attention_forward(input_ids, kp):
    # TODO(synk): embedding lookup (gather) stays as XLA glue.
    emb = jnp.take(kp['embedding'], input_ids, axis=0)                 # (B, S, E)
    x = jnp.transpose(emb, (1, 0, 2)).astype(jnp.float32)              # (S, B, E) — permute(1,0,2)
    x_rev = x[::-1]                                                    # time-reversed (bwd dir)
    x_cat = jnp.concatenate([x, x_rev], axis=-1).reshape(SEQ * BATCH, 2 * EMBED)

    vmem = lambda: pl.BlockSpec(memory_space=pltpu.MemorySpace.VMEM)
    return pl.pallas_call(
        fused_kernel,
        out_shape=jax.ShapeDtypeStruct((BATCH, NUM_CLASSES), jnp.float32),
        in_specs=[vmem() for _ in range(9)],
        out_specs=vmem(),
    )(x_cat, kp['wx_comb'], kp['b_comb'], kp['whh_comb'],
      kp['ws1'], kp['bs1'], kp['ws2'],
      kp['wfold'], kp['bfold'])


# --------------------------------------------------------------------------
# Pure-JAX f32 reference (the module's math, un-folded) for correctness check
# --------------------------------------------------------------------------
def reference_forward(input_ids, p):
    emb = jnp.take(p['embedding'], input_ids, axis=0)
    x = jnp.transpose(emb, (1, 0, 2)).astype(jnp.float32)

    def cell(x_t, h, c, wih, whh, b):
        gates = x_t @ wih + h @ whh + b
        i = jax.nn.sigmoid(gates[:, :HIDDEN])
        f = jax.nn.sigmoid(gates[:, HIDDEN:2 * HIDDEN])
        g = jnp.tanh(gates[:, 2 * HIDDEN:3 * HIDDEN])
        o = jax.nn.sigmoid(gates[:, 3 * HIDDEN:])
        c = f * c + i * g
        return o * jnp.tanh(c), c

    hf = cf = hb = cb = jnp.zeros((BATCH, HIDDEN), jnp.float32)
    outs_f = [None] * SEQ
    outs_b = [None] * SEQ
    for t in range(SEQ):
        hf, cf = cell(x[t], hf, cf, p['wih_f'], p['whh_f'], p['b_f'])
        outs_f[t] = hf
        tb = SEQ - 1 - t
        hb, cb = cell(x[tb], hb, cb, p['wih_b'], p['whh_b'], p['b_b'])
        outs_b[tb] = hb
    out = jnp.concatenate([jnp.stack(outs_f, 0), jnp.stack(outs_b, 0)], axis=-1)
    lstm_out = jnp.transpose(out, (1, 0, 2))                           # (B, S, 2H)

    s1 = jnp.tanh(lstm_out @ p['ws1'] + p['bs1'])
    scores = s1 @ p['ws2'] + p['bs2']                                  # (B, S, R)
    attn = jax.nn.softmax(jnp.transpose(scores, (0, 2, 1)), axis=2)
    hidden = jnp.einsum('brs,bsd->brd', attn, lstm_out)
    flat = hidden.reshape(BATCH, -1)
    fc = flat @ p['wfc'] + p['bfc']
    return fc @ p['wlab'] + p['blab']


# --------------------------------------------------------------------------
# Deterministic parameter init (shapes from the module's __init__)
# --------------------------------------------------------------------------
def init_params(key):
    ks = jax.random.split(key, 15)

    def w(k, shape, scale=0.1):
        return (scale * jax.random.normal(k, shape)).astype(jnp.float32)

    return dict(
        embedding=w(ks[0], (VOCAB, EMBED), 0.5),
        # LSTM weights stored transposed relative to PyTorch ((in, 4H)),
        # gate order i,f,g,o; bias = b_ih + b_hh folded into one (1, 4H) row.
        wih_f=w(ks[1], (EMBED, 4 * HIDDEN)), whh_f=w(ks[2], (HIDDEN, 4 * HIDDEN)),
        b_f=w(ks[3], (1, 4 * HIDDEN)),
        wih_b=w(ks[4], (EMBED, 4 * HIDDEN)), whh_b=w(ks[5], (HIDDEN, 4 * HIDDEN)),
        b_b=w(ks[6], (1, 4 * HIDDEN)),
        ws1=w(ks[7], (2 * HIDDEN, ATTN_D1)), bs1=w(ks[8], (1, ATTN_D1)),
        ws2=w(ks[9], (ATTN_D1, ATTN_HOPS)), bs2=w(ks[10], (1, ATTN_HOPS)),
        wfc=w(ks[11], (ATTN_HOPS * 2 * HIDDEN, FC_DIM), 0.02), bfc=w(ks[12], (1, FC_DIM)),
        wlab=w(ks[13], (FC_DIM, NUM_CLASSES)), blab=w(ks[14], (1, NUM_CLASSES)),
    )


if __name__ == "__main__":
    key = jax.random.PRNGKey(0)
    k_params, k_ids = jax.random.split(key)
    params = init_params(k_params)
    input_ids = jax.random.randint(k_ids, (BATCH, SEQ), 0, VOCAB, dtype=jnp.int32)

    kernel_params = prepare_kernel_params(params)
    logits = self_attention_forward(input_ids, kernel_params)
    jax.block_until_ready(logits)

    ref = reference_forward(input_ids, params)
    # All math is f32; the only approximations are the EUP approximate
    # reciprocal in the softmax and the (exact-in-real-arithmetic) fc/label
    # weight fold — both well inside 5e-3.
    np.testing.assert_allclose(np.asarray(logits), np.asarray(ref),
                               rtol=5e-3, atol=5e-3)
    print("KERNEL_OK")
</pallas_src>

<mosaic_0001>
module attributes {stable_mosaic.version = 11 : i64} {
  func.func @fused_kernel(%arg0: memref<16x64xf32, #tpu.memory_space<vmem>>, %arg1: memref<64x256xf32, #tpu.memory_space<vmem>>, %arg2: memref<1x256xf32, #tpu.memory_space<vmem>>, %arg3: memref<64x256xf32, #tpu.memory_space<vmem>>, %arg4: memref<64x128xf32, #tpu.memory_space<vmem>>, %arg5: memref<1x128xf32, #tpu.memory_space<vmem>>, %arg6: memref<128x32xf32, #tpu.memory_space<vmem>>, %arg7: memref<2x32x64xf32, #tpu.memory_space<vmem>>, %arg8: memref<1x2xf32, #tpu.memory_space<vmem>>, %arg9: memref<2x2xf32, #tpu.memory_space<vmem>>) attributes {dimension_semantics = [], scalar_prefetch = 0 : i64, scratch_operands = 0 : i64, tpu.core_type = #tpu.core_type<tc>} {
    %c0 = arith.constant 0 : index
    %c0_0 = arith.constant 0 : index
    %0 = vector.load %arg0[%c0, %c0_0] : memref<16x64xf32, #tpu.memory_space<vmem>>, vector<16x64xf32>
    %c0_1 = arith.constant 0 : index
    %c0_2 = arith.constant 0 : index
    %1 = vector.load %arg1[%c0_1, %c0_2] : memref<64x256xf32, #tpu.memory_space<vmem>>, vector<64x256xf32>
    %cst = arith.constant dense<0.000000e+00> : vector<16x256xf32>
    %2 = tpu.matmul %0, %1, %cst {dimension_numbers = #tpu.dot_dimension_numbers<[1], [0], [0], [1], [0, 0, 1, 1], [], []>} : vector<16x64xf32>, vector<64x256xf32>, vector<16x256xf32> -> vector<16x256xf32>
    %c0_3 = arith.constant 0 : index
    %c0_4 = arith.constant 0 : index
    %3 = vector.load %arg2[%c0_3, %c0_4] : memref<1x256xf32, #tpu.memory_space<vmem>>, vector<1x256xf32>
    %4 = vector.broadcast %3 : vector<1x256xf32> to vector<16x256xf32>
    %5 = arith.addf %2, %4 : vector<16x256xf32>
    %c0_5 = arith.constant 0 : index
    %c0_6 = arith.constant 0 : index
    %6 = vector.load %arg3[%c0_5, %c0_6] : memref<64x256xf32, #tpu.memory_space<vmem>>, vector<64x256xf32>
    %cst_7 = arith.constant 0.000000e+00 : f32
    %7 = vector.broadcast %cst_7 : f32 to vector<2x64xf32>
    %cst_8 = arith.constant 0.000000e+00 : f32
    %8 = vector.broadcast %cst_8 : f32 to vector<2x64xf32>
    %9 = vector.extract_strided_slice %5 {offsets = [0, 0], sizes = [2, 256], strides = [1, 1]} : vector<16x256xf32> to vector<2x256xf32>
    %cst_9 = arith.constant dense<0.000000e+00> : vector<2x256xf32>
    %10 = tpu.matmul %7, %6, %cst_9 {dimension_numbers = #tpu.dot_dimension_numbers<[1], [0], [0], [1], [0, 0, 1, 1], [], []>} : vector<2x64xf32>, vector<64x256xf32>, vector<2x256xf32> -> vector<2x256xf32>
    %11 = arith.addf %9, %10 : vector<2x256xf32>
    %12 = vector.extract_strided_slice %11 {offsets = [0, 0], sizes = [2, 64], strides = [1, 1]} : vector<2x256xf32> to vector<2x64xf32>
    %13 = arith.negf %12 : vector<2x64xf32>
    %14 = math.exp %13 : vector<2x64xf32>
    %cst_10 = arith.constant 1.000000e+00 : f32
    %15 = vector.broadcast %cst_10 : f32 to vector<2x64xf32>
    %16 = arith.addf %15, %14 : vector<2x64xf32>
    %17 = arith.divf %15, %16 : vector<2x64xf32>
    %18 = vector.extract_strided_slice %11 {offsets = [0, 64], sizes = [2, 64], strides = [1, 1]} : vector<2x256xf32> to vector<2x64xf32>
    %19 = arith.negf %18 : vector<2x64xf32>
    %20 = math.exp %19 : vector<2x64xf32>
    %cst_11 = arith.constant 1.000000e+00 : f32
    %21 = vector.broadcast %cst_11 : f32 to vector<2x64xf32>
    %22 = arith.addf %21, %20 : vector<2x64xf32>
    %23 = arith.divf %21, %22 : vector<2x64xf32>
    %24 = vector.extract_strided_slice %11 {offsets = [0, 128], sizes = [2, 64], strides = [1, 1]} : vector<2x256xf32> to vector<2x64xf32>
    %25 = math.tanh %24 : vector<2x64xf32>
    %26 = vector.extract_strided_slice %11 {offsets = [0, 192], sizes = [2, 64], strides = [1, 1]} : vector<2x256xf32> to vector<2x64xf32>
    %27 = arith.negf %26 : vector<2x64xf32>
    %28 = math.exp %27 : vector<2x64xf32>
    %cst_12 = arith.constant 1.000000e+00 : f32
    %29 = vector.broadcast %cst_12 : f32 to vector<2x64xf32>
    %30 = arith.addf %29, %28 : vector<2x64xf32>
    %31 = arith.divf %29, %30 : vector<2x64xf32>
    %32 = arith.mulf %23, %8 : vector<2x64xf32>
    %33 = arith.mulf %17, %25 : vector<2x64xf32>
    %34 = arith.addf %32, %33 : vector<2x64xf32>
    %35 = math.tanh %34 : vector<2x64xf32>
    %36 = arith.mulf %31, %35 : vector<2x64xf32>
    %37 = vector.extract_strided_slice %5 {offsets = [2, 0], sizes = [2, 256], strides = [1, 1]} : vector<16x256xf32> to vector<2x256xf32>
    %cst_13 = arith.constant dense<0.000000e+00> : vector<2x256xf32>
    %38 = tpu.matmul %36, %6, %cst_13 {dimension_numbers = #tpu.dot_dimension_numbers<[1], [0], [0], [1], [0, 0, 1, 1], [], []>} : vector<2x64xf32>, vector<64x256xf32>, vector<2x256xf32> -> vector<2x256xf32>
    %39 = arith.addf %37, %38 : vector<2x256xf32>
    %40 = vector.extract_strided_slice %39 {offsets = [0, 0], sizes = [2, 64], strides = [1, 1]} : vector<2x256xf32> to vector<2x64xf32>
    %41 = arith.negf %40 : vector<2x64xf32>
    %42 = math.exp %41 : vector<2x64xf32>
    %cst_14 = arith.constant 1.000000e+00 : f32
    %43 = vector.broadcast %cst_14 : f32 to vector<2x64xf32>
    %44 = arith.addf %43, %42 : vector<2x64xf32>
    %45 = arith.divf %43, %44 : vector<2x64xf32>
    %46 = vector.extract_strided_slice %39 {offsets = [0, 64], sizes = [2, 64], strides = [1, 1]} : vector<2x256xf32> to vector<2x64xf32>
    %47 = arith.negf %46 : vector<2x64xf32>
    %48 = math.exp %47 : vector<2x64xf32>
    %cst_15 = arith.constant 1.000000e+00 : f32
    %49 = vector.broadcast %cst_15 : f32 to vector<2x64xf32>
    %50 = arith.addf %49, %48 : vector<2x64xf32>
    %51 = arith.divf %49, %50 : vector<2x64xf32>
    %52 = vector.extract_strided_slice %39 {offsets = [0, 128], sizes = [2, 64], strides = [1, 1]} : vector<2x256xf32> to vector<2x64xf32>
    %53 = math.tanh %52 : vector<2x64xf32>
    %54 = vector.extract_strided_slice %39 {offsets = [0, 192], sizes = [2, 64], strides = [1, 1]} : vector<2x256xf32> to vector<2x64xf32>
    %55 = arith.negf %54 : vector<2x64xf32>
    %56 = math.exp %55 : vector<2x64xf32>
    %cst_16 = arith.constant 1.000000e+00 : f32
    %57 = vector.broadcast %cst_16 : f32 to vector<2x64xf32>
    %58 = arith.addf %57, %56 : vector<2x64xf32>
    %59 = arith.divf %57, %58 : vector<2x64xf32>
    %60 = arith.mulf %51, %34 : vector<2x64xf32>
    %61 = arith.mulf %45, %53 : vector<2x64xf32>
    %62 = arith.addf %60, %61 : vector<2x64xf32>
    %63 = math.tanh %62 : vector<2x64xf32>
    %64 = arith.mulf %59, %63 : vector<2x64xf32>
    %65 = vector.extract_strided_slice %5 {offsets = [4, 0], sizes = [2, 256], strides = [1, 1]} : vector<16x256xf32> to vector<2x256xf32>
    %cst_17 = arith.constant dense<0.000000e+00> : vector<2x256xf32>
    %66 = tpu.matmul %64, %6, %cst_17 {dimension_numbers = #tpu.dot_dimension_numbers<[1], [0], [0], [1], [0, 0, 1, 1], [], []>} : vector<2x64xf32>, vector<64x256xf32>, vector<2x256xf32> -> vector<2x256xf32>
    %67 = arith.addf %65, %66 : vector<2x256xf32>
    %68 = vector.extract_strided_slice %67 {offsets = [0, 0], sizes = [2, 64], strides = [1, 1]} : vector<2x256xf32> to vector<2x64xf32>
    %69 = arith.negf %68 : vector<2x64xf32>
    %70 = math.exp %69 : vector<2x64xf32>
    %cst_18 = arith.constant 1.000000e+00 : f32
    %71 = vector.broadcast %cst_18 : f32 to vector<2x64xf32>
    %72 = arith.addf %71, %70 : vector<2x64xf32>
    %73 = arith.divf %71, %72 : vector<2x64xf32>
    %74 = vector.extract_strided_slice %67 {offsets = [0, 64], sizes = [2, 64], strides = [1, 1]} : vector<2x256xf32> to vector<2x64xf32>
    %75 = arith.negf %74 : vector<2x64xf32>
    %76 = math.exp %75 : vector<2x64xf32>
    %cst_19 = arith.constant 1.000000e+00 : f32
    %77 = vector.broadcast %cst_19 : f32 to vector<2x64xf32>
    %78 = arith.addf %77, %76 : vector<2x64xf32>
    %79 = arith.divf %77, %78 : vector<2x64xf32>
    %80 = vector.extract_strided_slice %67 {offsets = [0, 128], sizes = [2, 64], strides = [1, 1]} : vector<2x256xf32> to vector<2x64xf32>
    %81 = math.tanh %80 : vector<2x64xf32>
    %82 = vector.extract_strided_slice %67 {offsets = [0, 192], sizes = [2, 64], strides = [1, 1]} : vector<2x256xf32> to vector<2x64xf32>
    %83 = arith.negf %82 : vector<2x64xf32>
    %84 = math.exp %83 : vector<2x64xf32>
    %cst_20 = arith.constant 1.000000e+00 : f32
    %85 = vector.broadcast %cst_20 : f32 to vector<2x64xf32>
    %86 = arith.addf %85, %84 : vector<2x64xf32>
    %87 = arith.divf %85, %86 : vector<2x64xf32>
    %88 = arith.mulf %79, %62 : vector<2x64xf32>
    %89 = arith.mulf %73, %81 : vector<2x64xf32>
    %90 = arith.addf %88, %89 : vector<2x64xf32>
    %91 = math.tanh %90 : vector<2x64xf32>
    %92 = arith.mulf %87, %91 : vector<2x64xf32>
    %93 = vector.extract_strided_slice %5 {offsets = [6, 0], sizes = [2, 256], strides = [1, 1]} : vector<16x256xf32> to vector<2x256xf32>
    %cst_21 = arith.constant dense<0.000000e+00> : vector<2x256xf32>
    %94 = tpu.matmul %92, %6, %cst_21 {dimension_numbers = #tpu.dot_dimension_numbers<[1], [0], [0], [1], [0, 0, 1, 1], [], []>} : vector<2x64xf32>, vector<64x256xf32>, vector<2x256xf32> -> vector<2x256xf32>
    %95 = arith.addf %93, %94 : vector<2x256xf32>
    %96 = vector.extract_strided_slice %95 {offsets = [0, 0], sizes = [2, 64], strides = [1, 1]} : vector<2x256xf32> to vector<2x64xf32>
    %97 = arith.negf %96 : vector<2x64xf32>
    %98 = math.exp %97 : vector<2x64xf32>
    %cst_22 = arith.constant 1.000000e+00 : f32
    %99 = vector.broadcast %cst_22 : f32 to vector<2x64xf32>
    %100 = arith.addf %99, %98 : vector<2x64xf32>
    %101 = arith.divf %99, %100 : vector<2x64xf32>
    %102 = vector.extract_strided_slice %95 {offsets = [0, 64], sizes = [2, 64], strides = [1, 1]} : vector<2x256xf32> to vector<2x64xf32>
    %103 = arith.negf %102 : vector<2x64xf32>
    %104 = math.exp %103 : vector<2x64xf32>
    %cst_23 = arith.constant 1.000000e+00 : f32
    %105 = vector.broadcast %cst_23 : f32 to vector<2x64xf32>
    %106 = arith.addf %105, %104 : vector<2x64xf32>
    %107 = arith.divf %105, %106 : vector<2x64xf32>
    %108 = vector.extract_strided_slice %95 {offsets = [0, 128], sizes = [2, 64], strides = [1, 1]} : vector<2x256xf32> to vector<2x64xf32>
    %109 = math.tanh %108 : vector<2x64xf32>
    %110 = vector.extract_strided_slice %95 {offsets = [0, 192], sizes = [2, 64], strides = [1, 1]} : vector<2x256xf32> to vector<2x64xf32>
    %111 = arith.negf %110 : vector<2x64xf32>
    %112 = math.exp %111 : vector<2x64xf32>
    %cst_24 = arith.constant 1.000000e+00 : f32
    %113 = vector.broadcast %cst_24 : f32 to vector<2x64xf32>
    %114 = arith.addf %113, %112 : vector<2x64xf32>
    %115 = arith.divf %113, %114 : vector<2x64xf32>
    %116 = arith.mulf %107, %90 : vector<2x64xf32>
    %117 = arith.mulf %101, %109 : vector<2x64xf32>
    %118 = arith.addf %116, %117 : vector<2x64xf32>
    %119 = math.tanh %118 : vector<2x64xf32>
    %120 = arith.mulf %115, %119 : vector<2x64xf32>
    %121 = vector.extract_strided_slice %5 {offsets = [8, 0], sizes = [2, 256], strides = [1, 1]} : vector<16x256xf32> to vector<2x256xf32>
    %cst_25 = arith.constant dense<0.000000e+00> : vector<2x256xf32>
    %122 = tpu.matmul %120, %6, %cst_25 {dimension_numbers = #tpu.dot_dimension_numbers<[1], [0], [0], [1], [0, 0, 1, 1], [], []>} : vector<2x64xf32>, vector<64x256xf32>, vector<2x256xf32> -> vector<2x256xf32>
    %123 = arith.addf %121, %122 : vector<2x256xf32>
    %124 = vector.extract_strided_slice %123 {offsets = [0, 0], sizes = [2, 64], strides = [1, 1]} : vector<2x256xf32> to vector<2x64xf32>
    %125 = arith.negf %124 : vector<2x64xf32>
    %126 = math.exp %125 : vector<2x64xf32>
    %cst_26 = arith.constant 1.000000e+00 : f32
    %127 = vector.broadcast %cst_26 : f32 to vector<2x64xf32>
    %128 = arith.addf %127, %126 : vector<2x64xf32>
    %129 = arith.divf %127, %128 : vector<2x64xf32>
    %130 = vector.extract_strided_slice %123 {offsets = [0, 64], sizes = [2, 64], strides = [1, 1]} : vector<2x256xf32> to vector<2x64xf32>
    %131 = arith.negf %130 : vector<2x64xf32>
    %132 = math.exp %131 : vector<2x64xf32>
    %cst_27 = arith.constant 1.000000e+00 : f32
    %133 = vector.broadcast %cst_27 : f32 to vector<2x64xf32>
    %134 = arith.addf %133, %132 : vector<2x64xf32>
    %135 = arith.divf %133, %134 : vector<2x64xf32>
    %136 = vector.extract_strided_slice %123 {offsets = [0, 128], sizes = [2, 64], strides = [1, 1]} : vector<2x256xf32> to vector<2x64xf32>
    %137 = math.tanh %136 : vector<2x64xf32>
    %138 = vector.extract_strided_slice %123 {offsets = [0, 192], sizes = [2, 64], strides = [1, 1]} : vector<2x256xf32> to vector<2x64xf32>
    %139 = arith.negf %138 : vector<2x64xf32>
    %140 = math.exp %139 : vector<2x64xf32>
    %cst_28 = arith.constant 1.000000e+00 : f32
    %141 = vector.broadcast %cst_28 : f32 to vector<2x64xf32>
    %142 = arith.addf %141, %140 : vector<2x64xf32>
    %143 = arith.divf %141, %142 : vector<2x64xf32>
    %144 = arith.mulf %135, %118 : vector<2x64xf32>
    %145 = arith.mulf %129, %137 : vector<2x64xf32>
    %146 = arith.addf %144, %145 : vector<2x64xf32>
    %147 = math.tanh %146 : vector<2x64xf32>
    %148 = arith.mulf %143, %147 : vector<2x64xf32>
    %149 = vector.extract_strided_slice %5 {offsets = [10, 0], sizes = [2, 256], strides = [1, 1]} : vector<16x256xf32> to vector<2x256xf32>
    %cst_29 = arith.constant dense<0.000000e+00> : vector<2x256xf32>
    %150 = tpu.matmul %148, %6, %cst_29 {dimension_numbers = #tpu.dot_dimension_numbers<[1], [0], [0], [1], [0, 0, 1, 1], [], []>} : vector<2x64xf32>, vector<64x256xf32>, vector<2x256xf32> -> vector<2x256xf32>
    %151 = arith.addf %149, %150 : vector<2x256xf32>
    %152 = vector.extract_strided_slice %151 {offsets = [0, 0], sizes = [2, 64], strides = [1, 1]} : vector<2x256xf32> to vector<2x64xf32>
    %153 = arith.negf %152 : vector<2x64xf32>
    %154 = math.exp %153 : vector<2x64xf32>
    %cst_30 = arith.constant 1.000000e+00 : f32
    %155 = vector.broadcast %cst_30 : f32 to vector<2x64xf32>
    %156 = arith.addf %155, %154 : vector<2x64xf32>
    %157 = arith.divf %155, %156 : vector<2x64xf32>
    %158 = vector.extract_strided_slice %151 {offsets = [0, 64], sizes = [2, 64], strides = [1, 1]} : vector<2x256xf32> to vector<2x64xf32>
    %159 = arith.negf %158 : vector<2x64xf32>
    %160 = math.exp %159 : vector<2x64xf32>
    %cst_31 = arith.constant 1.000000e+00 : f32
    %161 = vector.broadcast %cst_31 : f32 to vector<2x64xf32>
    %162 = arith.addf %161, %160 : vector<2x64xf32>
    %163 = arith.divf %161, %162 : vector<2x64xf32>
    %164 = vector.extract_strided_slice %151 {offsets = [0, 128], sizes = [2, 64], strides = [1, 1]} : vector<2x256xf32> to vector<2x64xf32>
    %165 = math.tanh %164 : vector<2x64xf32>
    %166 = vector.extract_strided_slice %151 {offsets = [0, 192], sizes = [2, 64], strides = [1, 1]} : vector<2x256xf32> to vector<2x64xf32>
    %167 = arith.negf %166 : vector<2x64xf32>
    %168 = math.exp %167 : vector<2x64xf32>
    %cst_32 = arith.constant 1.000000e+00 : f32
    %169 = vector.broadcast %cst_32 : f32 to vector<2x64xf32>
    %170 = arith.addf %169, %168 : vector<2x64xf32>
    %171 = arith.divf %169, %170 : vector<2x64xf32>
    %172 = arith.mulf %163, %146 : vector<2x64xf32>
    %173 = arith.mulf %157, %165 : vector<2x64xf32>
    %174 = arith.addf %172, %173 : vector<2x64xf32>
    %175 = math.tanh %174 : vector<2x64xf32>
    %176 = arith.mulf %171, %175 : vector<2x64xf32>
    %177 = vector.extract_strided_slice %5 {offsets = [12, 0], sizes = [2, 256], strides = [1, 1]} : vector<16x256xf32> to vector<2x256xf32>
    %cst_33 = arith.constant dense<0.000000e+00> : vector<2x256xf32>
    %178 = tpu.matmul %176, %6, %cst_33 {dimension_numbers = #tpu.dot_dimension_numbers<[1], [0], [0], [1], [0, 0, 1, 1], [], []>} : vector<2x64xf32>, vector<64x256xf32>, vector<2x256xf32> -> vector<2x256xf32>
    %179 = arith.addf %177, %178 : vector<2x256xf32>
    %180 = vector.extract_strided_slice %179 {offsets = [0, 0], sizes = [2, 64], strides = [1, 1]} : vector<2x256xf32> to vector<2x64xf32>
    %181 = arith.negf %180 : vector<2x64xf32>
    %182 = math.exp %181 : vector<2x64xf32>
    %cst_34 = arith.constant 1.000000e+00 : f32
    %183 = vector.broadcast %cst_34 : f32 to vector<2x64xf32>
    %184 = arith.addf %183, %182 : vector<2x64xf32>
    %185 = arith.divf %183, %184 : vector<2x64xf32>
    %186 = vector.extract_strided_slice %179 {offsets = [0, 64], sizes = [2, 64], strides = [1, 1]} : vector<2x256xf32> to vector<2x64xf32>
    %187 = arith.negf %186 : vector<2x64xf32>
    %188 = math.exp %187 : vector<2x64xf32>
    %cst_35 = arith.constant 1.000000e+00 : f32
    %189 = vector.broadcast %cst_35 : f32 to vector<2x64xf32>
    %190 = arith.addf %189, %188 : vector<2x64xf32>
    %191 = arith.divf %189, %190 : vector<2x64xf32>
    %192 = vector.extract_strided_slice %179 {offsets = [0, 128], sizes = [2, 64], strides = [1, 1]} : vector<2x256xf32> to vector<2x64xf32>
    %193 = math.tanh %192 : vector<2x64xf32>
    %194 = vector.extract_strided_slice %179 {offsets = [0, 192], sizes = [2, 64], strides = [1, 1]} : vector<2x256xf32> to vector<2x64xf32>
    %195 = arith.negf %194 : vector<2x64xf32>
    %196 = math.exp %195 : vector<2x64xf32>
    %cst_36 = arith.constant 1.000000e+00 : f32
    %197 = vector.broadcast %cst_36 : f32 to vector<2x64xf32>
    %198 = arith.addf %197, %196 : vector<2x64xf32>
    %199 = arith.divf %197, %198 : vector<2x64xf32>
    %200 = arith.mulf %191, %174 : vector<2x64xf32>
    %201 = arith.mulf %185, %193 : vector<2x64xf32>
    %202 = arith.addf %200, %201 : vector<2x64xf32>
    %203 = math.tanh %202 : vector<2x64xf32>
    %204 = arith.mulf %199, %203 : vector<2x64xf32>
    %205 = vector.extract_strided_slice %5 {offsets = [14, 0], sizes = [2, 256], strides = [1, 1]} : vector<16x256xf32> to vector<2x256xf32>
    %cst_37 = arith.constant dense<0.000000e+00> : vector<2x256xf32>
    %206 = tpu.matmul %204, %6, %cst_37 {dimension_numbers = #tpu.dot_dimension_numbers<[1], [0], [0], [1], [0, 0, 1, 1], [], []>} : vector<2x64xf32>, vector<64x256xf32>, vector<2x256xf32> -> vector<2x256xf32>
    %207 = arith.addf %205, %206 : vector<2x256xf32>
    %208 = vector.extract_strided_slice %207 {offsets = [0, 0], sizes = [2, 64], strides = [1, 1]} : vector<2x256xf32> to vector<2x64xf32>
    %209 = arith.negf %208 : vector<2x64xf32>
    %210 = math.exp %209 : vector<2x64xf32>
    %cst_38 = arith.constant 1.000000e+00 : f32
    %211 = vector.broadcast %cst_38 : f32 to vector<2x64xf32>
    %212 = arith.addf %211, %210 : vector<2x64xf32>
    %213 = arith.divf %211, %212 : vector<2x64xf32>
    %214 = vector.extract_strided_slice %207 {offsets = [0, 64], sizes = [2, 64], strides = [1, 1]} : vector<2x256xf32> to vector<2x64xf32>
    %215 = arith.negf %214 : vector<2x64xf32>
    %216 = math.exp %215 : vector<2x64xf32>
    %cst_39 = arith.constant 1.000000e+00 : f32
    %217 = vector.broadcast %cst_39 : f32 to vector<2x64xf32>
    %218 = arith.addf %217, %216 : vector<2x64xf32>
    %219 = arith.divf %217, %218 : vector<2x64xf32>
    %220 = vector.extract_strided_slice %207 {offsets = [0, 128], sizes = [2, 64], strides = [1, 1]} : vector<2x256xf32> to vector<2x64xf32>
    %221 = math.tanh %220 : vector<2x64xf32>
    %222 = vector.extract_strided_slice %207 {offsets = [0, 192], sizes = [2, 64], strides = [1, 1]} : vector<2x256xf32> to vector<2x64xf32>
    %223 = arith.negf %222 : vector<2x64xf32>
    %224 = math.exp %223 : vector<2x64xf32>
    %cst_40 = arith.constant 1.000000e+00 : f32
    %225 = vector.broadcast %cst_40 : f32 to vector<2x64xf32>
    %226 = arith.addf %225, %224 : vector<2x64xf32>
    %227 = arith.divf %225, %226 : vector<2x64xf32>
    %228 = arith.mulf %219, %202 : vector<2x64xf32>
    %229 = arith.mulf %213, %221 : vector<2x64xf32>
    %230 = arith.addf %228, %229 : vector<2x64xf32>
    %231 = math.tanh %230 : vector<2x64xf32>
    %232 = arith.mulf %227, %231 : vector<2x64xf32>
    %233 = vector.extract_strided_slice %36 {offsets = [0, 0], sizes = [2, 32], strides = [1, 1]} : vector<2x64xf32> to vector<2x32xf32>
    %234 = vector.extract_strided_slice %232 {offsets = [0, 32], sizes = [2, 32], strides = [1, 1]} : vector<2x64xf32> to vector<2x32xf32>
    %235 = tpu.concatenate %233, %234 in 1 : vector<2x32xf32>, vector<2x32xf32> -> vector<2x64xf32>
    %236 = vector.extract_strided_slice %64 {offsets = [0, 0], sizes = [2, 32], strides = [1, 1]} : vector<2x64xf32> to vector<2x32xf32>
    %237 = vector.extract_strided_slice %204 {offsets = [0, 32], sizes = [2, 32], strides = [1, 1]} : vector<2x64xf32> to vector<2x32xf32>
    %238 = tpu.concatenate %236, %237 in 1 : vector<2x32xf32>, vector<2x32xf32> -> vector<2x64xf32>
    %239 = vector.extract_strided_slice %92 {offsets = [0, 0], sizes = [2, 32], strides = [1, 1]} : vector<2x64xf32> to vector<2x32xf32>
    %240 = vector.extract_strided_slice %176 {offsets = [0, 32], sizes = [2, 32], strides = [1, 1]} : vector<2x64xf32> to vector<2x32xf32>
    %241 = tpu.concatenate %239, %240 in 1 : vector<2x32xf32>, vector<2x32xf32> -> vector<2x64xf32>
    %242 = vector.extract_strided_slice %120 {offsets = [0, 0], sizes = [2, 32], strides = [1, 1]} : vector<2x64xf32> to vector<2x32xf32>
    %243 = vector.extract_strided_slice %148 {offsets = [0, 32], sizes = [2, 32], strides = [1, 1]} : vector<2x64xf32> to vector<2x32xf32>
    %244 = tpu.concatenate %242, %243 in 1 : vector<2x32xf32>, vector<2x32xf32> -> vector<2x64xf32>
    %245 = vector.extract_strided_slice %148 {offsets = [0, 0], sizes = [2, 32], strides = [1, 1]} : vector<2x64xf32> to vector<2x32xf32>
    %246 = vector.extract_strided_slice %120 {offsets = [0, 32], sizes = [2, 32], strides = [1, 1]} : vector<2x64xf32> to vector<2x32xf32>
    %247 = tpu.concatenate %245, %246 in 1 : vector<2x32xf32>, vector<2x32xf32> -> vector<2x64xf32>
    %248 = vector.extract_strided_slice %176 {offsets = [0, 0], sizes = [2, 32], strides = [1, 1]} : vector<2x64xf32> to vector<2x32xf32>
    %249 = vector.extract_strided_slice %92 {offsets = [0, 32], sizes = [2, 32], strides = [1, 1]} : vector<2x64xf32> to vector<2x32xf32>
    %250 = tpu.concatenate %248, %249 in 1 : vector<2x32xf32>, vector<2x32xf32> -> vector<2x64xf32>
    %251 = vector.extract_strided_slice %204 {offsets = [0, 0], sizes = [2, 32], strides = [1, 1]} : vector<2x64xf32> to vector<2x32xf32>
    %252 = vector.extract_strided_slice %64 {offsets = [0, 32], sizes = [2, 32], strides = [1, 1]} : vector<2x64xf32> to vector<2x32xf32>
    %253 = tpu.concatenate %251, %252 in 1 : vector<2x32xf32>, vector<2x32xf32> -> vector<2x64xf32>
    %254 = vector.extract_strided_slice %232 {offsets = [0, 0], sizes = [2, 32], strides = [1, 1]} : vector<2x64xf32> to vector<2x32xf32>
    %255 = vector.extract_strided_slice %36 {offsets = [0, 32], sizes = [2, 32], strides = [1, 1]} : vector<2x64xf32> to vector<2x32xf32>
    %256 = tpu.concatenate %254, %255 in 1 : vector<2x32xf32>, vector<2x32xf32> -> vector<2x64xf32>
    %257 = vector.extract_strided_slice %235 {offsets = [0, 0], sizes = [1, 64], strides = [1, 1]} : vector<2x64xf32> to vector<1x64xf32>
    %258 = vector.extract_strided_slice %238 {offsets = [0, 0], sizes = [1, 64], strides = [1, 1]} : vector<2x64xf32> to vector<1x64xf32>
    %259 = vector.extract_strided_slice %241 {offsets = [0, 0], sizes = [1, 64], strides = [1, 1]} : vector<2x64xf32> to vector<1x64xf32>
    %260 = vector.extract_strided_slice %244 {offsets = [0, 0], sizes = [1, 64], strides = [1, 1]} : vector<2x64xf32> to vector<1x64xf32>
    %261 = vector.extract_strided_slice %247 {offsets = [0, 0], sizes = [1, 64], strides = [1, 1]} : vector<2x64xf32> to vector<1x64xf32>
    %262 = vector.extract_strided_slice %250 {offsets = [0, 0], sizes = [1, 64], strides = [1, 1]} : vector<2x64xf32> to vector<1x64xf32>
    %263 = vector.extract_strided_slice %253 {offsets = [0, 0], sizes = [1, 64], strides = [1, 1]} : vector<2x64xf32> to vector<1x64xf32>
    %264 = vector.extract_strided_slice %256 {offsets = [0, 0], sizes = [1, 64], strides = [1, 1]} : vector<2x64xf32> to vector<1x64xf32>
    %265 = vector.extract_strided_slice %235 {offsets = [1, 0], sizes = [1, 64], strides = [1, 1]} : vector<2x64xf32> to vector<1x64xf32>
    %266 = vector.extract_strided_slice %238 {offsets = [1, 0], sizes = [1, 64], strides = [1, 1]} : vector<2x64xf32> to vector<1x64xf32>
    %267 = vector.extract_strided_slice %241 {offsets = [1, 0], sizes = [1, 64], strides = [1, 1]} : vector<2x64xf32> to vector<1x64xf32>
    %268 = vector.extract_strided_slice %244 {offsets = [1, 0], sizes = [1, 64], strides = [1, 1]} : vector<2x64xf32> to vector<1x64xf32>
    %269 = vector.extract_strided_slice %247 {offsets = [1, 0], sizes = [1, 64], strides = [1, 1]} : vector<2x64xf32> to vector<1x64xf32>
    %270 = vector.extract_strided_slice %250 {offsets = [1, 0], sizes = [1, 64], strides = [1, 1]} : vector<2x64xf32> to vector<1x64xf32>
    %271 = vector.extract_strided_slice %253 {offsets = [1, 0], sizes = [1, 64], strides = [1, 1]} : vector<2x64xf32> to vector<1x64xf32>
    %272 = vector.extract_strided_slice %256 {offsets = [1, 0], sizes = [1, 64], strides = [1, 1]} : vector<2x64xf32> to vector<1x64xf32>
    %273 = tpu.concatenate %257, %258, %259, %260, %261, %262, %263, %264, %265, %266, %267, %268, %269, %270, %271, %272 in 0 : vector<1x64xf32>, vector<1x64xf32>, vector<1x64xf32>, vector<1x64xf32>, vector<1x64xf32>, vector<1x64xf32>, vector<1x64xf32>, vector<1x64xf32>, vector<1x64xf32>, vector<1x64xf32>, vector<1x64xf32>, vector<1x64xf32>, vector<1x64xf32>, vector<1x64xf32>, vector<1x64xf32>, vector<1x64xf32> -> vector<16x64xf32>
    %c0_41 = arith.constant 0 : index
    %c0_42 = arith.constant 0 : index
    %274 = vector.load %arg4[%c0_41, %c0_42] : memref<64x128xf32, #tpu.memory_space<vmem>>, vector<64x128xf32>
    %cst_43 = arith.constant dense<0.000000e+00> : vector<16x128xf32>
    %275 = tpu.matmul %273, %274, %cst_43 {dimension_numbers = #tpu.dot_dimension_numbers<[1], [0], [0], [1], [0, 0, 1, 1], [], []>} : vector<16x64xf32>, vector<64x128xf32>, vector<16x128xf32> -> vector<16x128xf32>
    %c0_44 = arith.constant 0 : index
    %c0_45 = arith.constant 0 : index
    %276 = vector.load %arg5[%c0_44, %c0_45] : memref<1x128xf32, #tpu.memory_space<vmem>>, vector<1x128xf32>
    %277 = vector.broadcast %276 : vector<1x128xf32> to vector<16x128xf32>
    %278 = arith.addf %275, %277 : vector<16x128xf32>
    %279 = math.tanh %278 : vector<16x128xf32>
    %c0_46 = arith.constant 0 : index
    %c0_47 = arith.constant 0 : index
    %280 = vector.load %arg6[%c0_46, %c0_47] : memref<128x32xf32, #tpu.memory_space<vmem>>, vector<128x32xf32>
    %cst_48 = arith.constant dense<0.000000e+00> : vector<16x32xf32>
    %281 = tpu.matmul %279, %280, %cst_48 {dimension_numbers = #tpu.dot_dimension_numbers<[1], [0], [0], [1], [0, 0, 1, 1], [], []>} : vector<16x128xf32>, vector<128x32xf32>, vector<16x32xf32> -> vector<16x32xf32>
    %282 = vector.shape_cast %281 : vector<16x32xf32> to vector<2x8x32xf32>
    %cst_49 = arith.constant dense<0xFF800000> : vector<2x32xf32>
    %283 = vector.multi_reduction <maximumf>, %282, %cst_49 [1] : vector<2x8x32xf32> to vector<2x32xf32>
    %284 = vector.shape_cast %283 : vector<2x32xf32> to vector<2x1x32xf32>
    %285 = vector.broadcast %284 : vector<2x1x32xf32> to vector<2x8x32xf32>
    %286 = arith.subf %282, %285 : vector<2x8x32xf32>
    %287 = math.exp %286 : vector<2x8x32xf32>
    %cst_50 = arith.constant dense<0.000000e+00> : vector<2x32xf32>
    %288 = vector.multi_reduction <add>, %287, %cst_50 [1] : vector<2x8x32xf32> to vector<2x32xf32>
    %289 = vector.shape_cast %288 : vector<2x32xf32> to vector<2x1x32xf32>
    %290 = tpu.reciprocal %289 {approx = true} : vector<2x1x32xf32> -> vector<2x1x32xf32>
    %291 = vector.broadcast %290 : vector<2x1x32xf32> to vector<2x8x32xf32>
    %292 = arith.mulf %287, %291 : vector<2x8x32xf32>
    %293 = vector.shape_cast %292 : vector<2x8x32xf32> to vector<16x32xf32>
    %c0_51 = arith.constant 0 : index
    %c0_52 = arith.constant 0 : index
    %c0_53 = arith.constant 0 : index
    %294 = vector.load %arg7[%c0_51, %c0_52, %c0_53] : memref<2x32x64xf32, #tpu.memory_space<vmem>>, vector<1x32x64xf32>
    %295 = vector.shape_cast %294 : vector<1x32x64xf32> to vector<32x64xf32>
    %cst_54 = arith.constant dense<0.000000e+00> : vector<16x64xf32>
    %296 = tpu.matmul %293, %295, %cst_54 {dimension_numbers = #tpu.dot_dimension_numbers<[1], [0], [0], [1], [0, 0, 1, 1], [], []>} : vector<16x32xf32>, vector<32x64xf32>, vector<16x64xf32> -> vector<16x64xf32>
    %297 = arith.mulf %273, %296 : vector<16x64xf32>
    %298 = vector.shape_cast %297 : vector<16x64xf32> to vector<2x8x64xf32>
    %cst_55 = arith.constant dense<0.000000e+00> : vector<2x8xf32>
    %299 = vector.multi_reduction <add>, %298, %cst_55 [2] : vector<2x8x64xf32> to vector<2x8xf32>
    %300 = vector.shape_cast %299 : vector<2x8xf32> to vector<2x8x1xf32>
    %cst_56 = arith.constant dense<0.000000e+00> : vector<2x1xf32>
    %301 = vector.multi_reduction <add>, %300, %cst_56 [1] : vector<2x8x1xf32> to vector<2x1xf32>
    %c1 = arith.constant 1 : index
    %c0_57 = arith.constant 0 : index
    %c0_58 = arith.constant 0 : index
    %302 = vector.load %arg7[%c1, %c0_57, %c0_58] : memref<2x32x64xf32, #tpu.memory_space<vmem>>, vector<1x32x64xf32>
    %303 = vector.shape_cast %302 : vector<1x32x64xf32> to vector<32x64xf32>
    %cst_59 = arith.constant dense<0.000000e+00> : vector<16x64xf32>
    %304 = tpu.matmul %293, %303, %cst_59 {dimension_numbers = #tpu.dot_dimension_numbers<[1], [0], [0], [1], [0, 0, 1, 1], [], []>} : vector<16x32xf32>, vector<32x64xf32>, vector<16x64xf32> -> vector<16x64xf32>
    %305 = arith.mulf %273, %304 : vector<16x64xf32>
    %306 = vector.shape_cast %305 : vector<16x64xf32> to vector<2x8x64xf32>
    %cst_60 = arith.constant dense<0.000000e+00> : vector<2x8xf32>
    %307 = vector.multi_reduction <add>, %306, %cst_60 [2] : vector<2x8x64xf32> to vector<2x8xf32>
    %308 = vector.shape_cast %307 : vector<2x8xf32> to vector<2x8x1xf32>
    %cst_61 = arith.constant dense<0.000000e+00> : vector<2x1xf32>
    %309 = vector.multi_reduction <add>, %308, %cst_61 [1] : vector<2x8x1xf32> to vector<2x1xf32>
    %310 = tpu.concatenate %301, %309 in 1 : vector<2x1xf32>, vector<2x1xf32> -> vector<2x2xf32>
    %c0_62 = arith.constant 0 : index
    %c0_63 = arith.constant 0 : index
    %311 = vector.load %arg8[%c0_62, %c0_63] : memref<1x2xf32, #tpu.memory_space<vmem>>, vector<1x2xf32>
    %312 = vector.broadcast %311 : vector<1x2xf32> to vector<2x2xf32>
    %313 = arith.addf %310, %312 : vector<2x2xf32>
    %c0_64 = arith.constant 0 : index
    %c0_65 = arith.constant 0 : index
    %314 = vector.load %arg9[%c0_64, %c0_65] : memref<2x2xf32, #tpu.memory_space<vmem>>, vector<2x2xf32>
    tpu.vector_store %arg9[%c0_64, %c0_65], %313 {strides = array<i32>} : memref<2x2xf32, #tpu.memory_space<vmem>>, vector<2x2xf32>,
    return
  }
}

</mosaic_0001>

<llo_original>
// kernel: self_attention_forward.1
$region0: #{self_attention_forward.1}
  #allocation0 [shape = 'u32[]', space=smem, size = 0x4, offset = 0x4, fixed_abs, tag = 'smem constant byte address 0x4 - core index']
  #allocation1 [shape = 'u32[144,128]{1,0:T(1,128)}', space=vmem, size = 0x12000, scoped, tag = 'internal scratch']
  %s0 = inlined_call_operand.vmem [shape: f32[16,64], index: 0, kind: input, shape index: {}]
  %s1 = inlined_call_operand.vmem [shape: f32[64,256], index: 1, kind: input, shape index: {}]
  %s2 = inlined_call_operand.vmem [shape: f32[1,256], index: 2, kind: input, shape index: {}]
  %s3 = inlined_call_operand.vmem [shape: f32[64,256], index: 3, kind: input, shape index: {}]
  %s4 = inlined_call_operand.vmem [shape: f32[64,128], index: 4, kind: input, shape index: {}]
  %s5 = inlined_call_operand.vmem [shape: f32[1,128], index: 5, kind: input, shape index: {}]
  %s6 = inlined_call_operand.vmem [shape: f32[128,32], index: 6, kind: input, shape index: {}]
  %s7 = inlined_call_operand.vmem [shape: f32[2,32,64], index: 7, kind: input, shape index: {}]
  %s8 = inlined_call_operand.vmem [shape: f32[1,2], index: 8, kind: input, shape index: {}]
  %s9 = inlined_call_operand.hbm [shape: f32[2,2], index: 9, kind: output, shape index: {}]
  %s10 = sld [smem:[#allocation0]]
  $region46: #{self_attention_forward.1} parent=0
    _
  %s12 = ssub.s32 1, %s10
  %s13 = scalar_select 0, %s12, %s10
  $region1: #{self_attention_forward.1} parent=0
    #allocation2 [shape = 'u8[1024]{0}', space=vmem, size = 0x400, scoped, tag = 'output window, operand 0, single buffered']
    #allocation3 [shape = 's32[1]{0}', space=sflag, size = 0x4, scoped, tag = 'scoped memory for self_attention_forward.1']
    %14 = vsyncpa [#allocation3], 0
    // Predicated region
    $region2: #{self_attention_forward.1} parent=1 // pred_check
      _
    $region3: #{self_attention_forward.1} parent=1 // pred_check_branch
      %16 = sbr.rel (0) target = $region5
    $region4: #{self_attention_forward.1} parent=1 // pred_region
      _
    $region5: #{self_attention_forward.1} parent=1 // pred_fallthru
      _
    // Predicated region
    $region6: #{self_attention_forward.1} parent=1 // pred_check
      _
    $region7: #{self_attention_forward.1} parent=1 // pred_check_branch
      %18 = sbr.rel (0) target = $region9
    $region8: #{self_attention_forward.1} parent=1 // pred_region
      _
    $region9: #{self_attention_forward.1} parent=1 // pred_fallthru
      _
    // Predicated region
    $region10: #{self_attention_forward.1} parent=1 // pred_check
      _
    $region11: #{self_attention_forward.1} parent=1 // pred_check_branch
      %20 = sbr.rel (0) target = $region13
    $region12: #{self_attention_forward.1} parent=1 // pred_region
      _
    $region13: #{self_attention_forward.1} parent=1 // pred_fallthru
      _
    // Predicated region
    $region14: #{self_attention_forward.1} parent=1 // pred_check
      _
    $region15: #{self_attention_forward.1} parent=1 // pred_check_branch
      %22 = sbr.rel (0) target = $region17
    $region16: #{self_attention_forward.1} parent=1 // pred_region
      _
    $region17: #{self_attention_forward.1} parent=1 // pred_fallthru
      _
    // Predicated region
    $region18: #{self_attention_forward.1} parent=1 // pred_check
      _
    $region19: #{self_attention_forward.1} parent=1 // pred_check_branch
      %24 = sbr.rel (0) target = $region21
    $region20: #{self_attention_forward.1} parent=1 // pred_region
      _
    $region21: #{self_attention_forward.1} parent=1 // pred_fallthru
      _
    // Predicated region
    $region22: #{self_attention_forward.1} parent=1 // pred_check
      _
    $region23: #{self_attention_forward.1} parent=1 // pred_check_branch
      %26 = sbr.rel (0) target = $region25
    $region24: #{self_attention_forward.1} parent=1 // pred_region
      _
    $region25: #{self_attention_forward.1} parent=1 // pred_fallthru
      _
    // Predicated region
    $region26: #{self_attention_forward.1} parent=1 // pred_check
      _
    $region27: #{self_attention_forward.1} parent=1 // pred_check_branch
      %28 = sbr.rel (0) target = $region29
    $region28: #{self_attention_forward.1} parent=1 // pred_region
      _
    $region29: #{self_attention_forward.1} parent=1 // pred_fallthru
      _
    // Predicated region
    $region30: #{self_attention_forward.1} parent=1 // pred_check
      _
    $region31: #{self_attention_forward.1} parent=1 // pred_check_branch
      %30 = sbr.rel (0) target = $region33
    $region32: #{self_attention_forward.1} parent=1 // pred_region
      _
    $region33: #{self_attention_forward.1} parent=1 // pred_fallthru
      _
    // Predicated region
    $region34: #{self_attention_forward.1} parent=1 // pred_check
      _
    $region35: #{self_attention_forward.1} parent=1 // pred_check_branch
      %32 = sbr.rel (0) target = $region37
    $region36: #{self_attention_forward.1} parent=1 // pred_region
      _
    $region37: #{self_attention_forward.1} parent=1 // pred_fallthru
      _
    %v33 = vld [vmem:[%s0] sm:$0xff]
    %v34 = vld [vmem:[%s0 + $0x8] sm:$0xff]
    %v35 = vld [vmem:[%s1] sm:$0xff]
    %v36 = vld [vmem:[%s1 + $0x8] sm:$0xff]
    %v37 = vld [vmem:[%s1 + $0x10] sm:$0xff]
    %v38 = vld [vmem:[%s1 + $0x18] sm:$0xff]
    %v39 = vld [vmem:[%s1 + $0x20] sm:$0xff]
    %v40 = vld [vmem:[%s1 + $0x28] sm:$0xff]
    %v41 = vld [vmem:[%s1 + $0x30] sm:$0xff]
    %v42 = vld [vmem:[%s1 + $0x38] sm:$0xff]
    %v43 = vld [vmem:[%s1 + $0x40] sm:$0xff]
    %v44 = vld [vmem:[%s1 + $0x48] sm:$0xff]
    %v45 = vld [vmem:[%s1 + $0x50] sm:$0xff]
    %v46 = vld [vmem:[%s1 + $0x58] sm:$0xff]
    %v47 = vld [vmem:[%s1 + $0x60] sm:$0xff]
    %v48 = vld [vmem:[%s1 + $0x68] sm:$0xff]
    %v49 = vld [vmem:[%s1 + $0x70] sm:$0xff]
    %v50 = vld [vmem:[%s1 + $0x78] sm:$0xff]
    %v51 = vld [vmem:[%s2] sm:$0x3]
    %v53 = vlaneseq
    %v54 = vshrl.u32 %v53, 7
    %v55 = vsub.s32 0, %v54
    %v56 = vrot.slane %v51, %v55
    %v57 = vlaneseq
    %v58 = vshrl.u32 %v57, 7
    %v59 = vsub.s32 1, %v58
    %v60 = vrot.slane %v51, %v59
    %vm63 = vcmask 523264
    %v65 = vsel %vm63, %v33, 0
    %v68 = vsel %vm63, %v34, 0
    %70 = vmatprep.subr.mxu0 %v36
    %71 = vmatpush1.msra.mxu0 %v35
    %72 = vmatprep.subr.mxu0 %v38
    %73 = vmatpush1.msra.mxu0 %v37
    %74 = vmatprep.subr.mxu0 %v40
    %75 = vmatpush1.msra.mxu0 %v39
    %76 = vmatprep.subr.mxu0 %v42
    %77 = vmatpush1.msra.mxu0 %v41
    %78 = vmatprep.subr.mxu0 %v44
    %79 = vmatpush1.msra.mxu0 %v43
    %80 = vmatprep.subr.mxu0 %v46
    %81 = vmatpush1.msra.mxu0 %v45
    %82 = vmatprep.subr.mxu0 %v48
    %83 = vmatpush1.msra.mxu0 %v47
    %84 = vmatprep.subr.mxu0 %v50
    %85 = vmatpush1.msra.mxu0 %v49
    %86 = vmatprep.subr.mxu0 0.0
    %87 = vmatpush1.msra.mxu0 0.0
    %88 = vmatprep.subr.mxu0 0.0
    %89 = vmatpush1.msra.mxu0 0.0
    %90 = vmatprep.subr.mxu0 0.0
    %91 = vmatpush1.msra.mxu0 0.0
    %92 = vmatprep.subr.mxu0 0.0
    %93 = vmatpush1.msra.mxu0 0.0
    %94 = vmatprep.subr.mxu0 0.0
    %95 = vmatpush1.msra.mxu0 0.0
    %96 = vmatprep.subr.mxu0 0.0
    %97 = vmatpush1.msra.mxu0 0.0
    %98 = vmatprep.subr.mxu0 0.0
    %99 = vmatpush1.msra.mxu0 0.0
    %100 = vmatprep.subr.mxu0 0.0
    %101 = vmatpush1.msra.mxu0 0.0
    %102 = vmatprep.subr.mxu0 0.0
    %103 = vmatpush1.msra.mxu0 0.0
    %104 = vmatprep.subr.mxu0 0.0
    %105 = vmatpush1.msra.mxu0 0.0
    %106 = vmatprep.subr.mxu0 0.0
    %107 = vmatpush1.msra.mxu0 0.0
    %108 = vmatprep.subr.mxu0 0.0
    %109 = vmatpush1.msra.mxu0 0.0
    %110 = vmatprep.subr.mxu0 0.0
    %111 = vmatpush1.msra.mxu0 0.0
    %112 = vmatprep.subr.mxu0 0.0
    %113 = vmatpush1.msra.mxu0 0.0
    %114 = vmatprep.subr.mxu0 0.0
    %115 = vmatpush1.msra.mxu0 0.0
    %116 = vmatprep.subr.mxu0 0.0
    %117 = vmatpush1.msra.mxu0 0.0
    %118 = vmatprep.subr.mxu0 0.0
    %119 = vmatpush1.msra.mxu0 0.0
    %120 = vmatprep.subr.mxu0 0.0
    %121 = vmatpush1.msra.mxu0 0.0
    %122 = vmatprep.subr.mxu0 0.0
    %123 = vmatpush1.msra.mxu0 0.0
    %124 = vmatprep.subr.mxu0 0.0
    %125 = vmatpush1.msra.mxu0 0.0
    %126 = vmatprep.subr.mxu0 0.0
    %127 = vmatpush1.msra.mxu0 0.0
    %128 = vmatprep.subr.mxu0 0.0
    %129 = vmatpush1.msra.mxu0 0.0
    %130 = vmatprep.subr.mxu0 0.0
    %131 = vmatpush1.msra.mxu0 0.0
    %132 = vmatprep.subr.mxu0 0.0
    %133 = vmatpush1.msra.mxu0 0.0
    %134 = vmatprep.mubr.f32.mxu0 0.0
    %135 = vmatmul.mubr.f32.gmra.mrb[0].mxu0 %v65
    %v136 = vpop.f32.mrb[0].mxu0
    %v137 = vadd.f32 %v56, %v136
    %v138 = vpop.f32.mrb[0].mxu0
    %v139 = vadd.f32 %v60, %v138
    %140 = vmatprep.mubr.f32.mxu0 0.0
    %141 = vmatmul.mubr.f32.gmra.mrb[0].mxu0 %v68
    %v142 = vpop.f32.mrb[0].mxu0
    %v143 = vadd.f32 %v56, %v142
    %v144 = vpop.f32.mrb[0].mxu0
    %v145 = vadd.f32 %v60, %v144
    %146 = vdwg.mxu0
    %v147 = vld [vmem:[%s3] sm:$0xff]
    %v148 = vld [vmem:[%s3 + $0x8] sm:$0xff]
    %v149 = vld [vmem:[%s3 + $0x10] sm:$0xff]
    %v150 = vld [vmem:[%s3 + $0x18] sm:$0xff]
    %v151 = vld [vmem:[%s3 + $0x20] sm:$0xff]
    %v152 = vld [vmem:[%s3 + $0x28] sm:$0xff]
    %v153 = vld [vmem:[%s3 + $0x30] sm:$0xff]
    %v154 = vld [vmem:[%s3 + $0x38] sm:$0xff]
    %v155 = vld [vmem:[%s3 + $0x40] sm:$0xff]
    %v156 = vld [vmem:[%s3 + $0x48] sm:$0xff]
    %v157 = vld [vmem:[%s3 + $0x50] sm:$0xff]
    %v158 = vld [vmem:[%s3 + $0x58] sm:$0xff]
    %v159 = vld [vmem:[%s3 + $0x60] sm:$0xff]
    %v160 = vld [vmem:[%s3 + $0x68] sm:$0xff]
    %v161 = vld [vmem:[%s3 + $0x70] sm:$0xff]
    %v162 = vld [vmem:[%s3 + $0x78] sm:$0xff]
    %v164 = vsel %vm63, 0.0, 0
    %166 = vmatprep.subr.mxu0 %v148
    %167 = vmatpush1.msra.mxu0 %v147
    %168 = vmatprep.subr.mxu0 %v150
    %169 = vmatpush1.msra.mxu0 %v149
    %170 = vmatprep.subr.mxu0 %v152
    %171 = vmatpush1.msra.mxu0 %v151
    %172 = vmatprep.subr.mxu0 %v154
    %173 = vmatpush1.msra.mxu0 %v153
    %174 = vmatprep.subr.mxu0 %v156
    %175 = vmatpush1.msra.mxu0 %v155
    %176 = vmatprep.subr.mxu0 %v158
    %177 = vmatpush1.msra.mxu0 %v157
    %178 = vmatprep.subr.mxu0 %v160
    %179 = vmatpush1.msra.mxu0 %v159
    %180 = vmatprep.subr.mxu0 %v162
    %181 = vmatpush1.msra.mxu0 %v161
    %182 = vmatprep.subr.mxu0 0.0
    %183 = vmatpush1.msra.mxu0 0.0
    %184 = vmatprep.subr.mxu0 0.0
    %185 = vmatpush1.msra.mxu0 0.0
    %186 = vmatprep.subr.mxu0 0.0
    %187 = vmatpush1.msra.mxu0 0.0
    %188 = vmatprep.subr.mxu0 0.0
    %189 = vmatpush1.msra.mxu0 0.0
    %190 = vmatprep.subr.mxu0 0.0
    %191 = vmatpush1.msra.mxu0 0.0
    %192 = vmatprep.subr.mxu0 0.0
    %193 = vmatpush1.msra.mxu0 0.0
    %194 = vmatprep.subr.mxu0 0.0
    %195 = vmatpush1.msra.mxu0 0.0
    %196 = vmatprep.subr.mxu0 0.0
    %197 = vmatpush1.msra.mxu0 0.0
    %198 = vmatprep.subr.mxu0 0.0
    %199 = vmatpush1.msra.mxu0 0.0
    %200 = vmatprep.subr.mxu0 0.0
    %201 = vmatpush1.msra.mxu0 0.0
    %202 = vmatprep.subr.mxu0 0.0
    %203 = vmatpush1.msra.mxu0 0.0
    %204 = vmatprep.subr.mxu0 0.0
    %205 = vmatpush1.msra.mxu0 0.0
    %206 = vmatprep.subr.mxu0 0.0
    %207 = vmatpush1.msra.mxu0 0.0
    %208 = vmatprep.subr.mxu0 0.0
    %209 = vmatpush1.msra.mxu0 0.0
    %210 = vmatprep.subr.mxu0 0.0
    %211 = vmatpush1.msra.mxu0 0.0
    %212 = vmatprep.subr.mxu0 0.0
    %213 = vmatpush1.msra.mxu0 0.0
    %214 = vmatprep.subr.mxu0 0.0
    %215 = vmatpush1.msra.mxu0 0.0
    %216 = vmatprep.subr.mxu0 0.0
    %217 = vmatpush1.msra.mxu0 0.0
    %218 = vmatprep.subr.mxu0 0.0
    %219 = vmatpush1.msra.mxu0 0.0
    %220 = vmatprep.subr.mxu0 0.0
    %221 = vmatpush1.msra.mxu0 0.0
    %222 = vmatprep.subr.mxu0 0.0
    %223 = vmatpush1.msra.mxu0 0.0
    %224 = vmatprep.subr.mxu0 0.0
    %225 = vmatpush1.msra.mxu0 0.0
    %226 = vmatprep.subr.mxu0 0.0
    %227 = vmatpush1.msra.mxu0 0.0
    %228 = vmatprep.subr.mxu0 0.0
    %229 = vmatpush1.msra.mxu0 0.0
    %230 = vmatprep.mubr.f32.mxu0 0.0
    %231 = vmatmul.mubr.f32.gmra.mrb[0].mxu0 %v164
    %v232 = vpop.f32.mrb[0].mxu0
    %v233 = vadd.f32 0.0, %v232
    %v234 = vpop.f32.mrb[0].mxu0
    %v235 = vadd.f32 0.0, %v234
    %236 = vdwg.mxu0
    %v237 = vadd.f32 %v137, %v233
    %v238 = vadd.f32 %v139, %v235
    %v239 = vxor.u32 %v237, 2147483648
    %v240 = vmul.f32 %v239, 1.442695
    %v241 = vpow.pop %v240
    %v242 = vadd.f32 %v241, 1.0
    %v243 = vrcp.pop %v242
    %v244 = vmul.f32 1.0, %v243
    %v245 = vtanh.pop %v238
    %v246 = vxor.u32 %v238, 2147483648
    %v247 = vmul.f32 %v246, 1.442695
    %v248 = vpow.pop %v247
    %v249 = vadd.f32 %v248, 1.0
    %v250 = vrcp.pop %v249
    %v251 = vmul.f32 1.0, %v250
    %v252 = vmul.f32 %v244, 0.0
    %v253 = vmul.f32 %v244, %v245
    %255 = vrot.lane.b32.xlu0 %v253, 64
    %v256 = vpop.permute.xlu0 %255
    %v258 = vadd.f32 %v252, %v256
    %v259 = vtanh.pop %v258
    %v260 = vmul.f32 %v251, %v259
    %262 = vrot.lane.b32.xlu0 %v260, 64
    %v263 = vpop.permute.xlu0 %262
    %v264 = vsel %vm63, %v263, 0
    %266 = vmatprep.subr.mxu0 %v148
    %267 = vmatpush1.msra.mxu0 %v147
    %268 = vmatprep.subr.mxu0 %v150
    %269 = vmatpush1.msra.mxu0 %v149
    %270 = vmatprep.subr.mxu0 %v152
    %271 = vmatpush1.msra.mxu0 %v151
    %272 = vmatprep.subr.mxu0 %v154
    %273 = vmatpush1.msra.mxu0 %v153
    %274 = vmatprep.subr.mxu0 %v156
    %275 = vmatpush1.msra.mxu0 %v155
    %276 = vmatprep.subr.mxu0 %v158
    %277 = vmatpush1.msra.mxu0 %v157
    %278 = vmatprep.subr.mxu0 %v160
    %279 = vmatpush1.msra.mxu0 %v159
    %280 = vmatprep.subr.mxu0 %v162
    %281 = vmatpush1.msra.mxu0 %v161
    %282 = vmatprep.subr.mxu0 0.0
    %283 = vmatpush1.msra.mxu0 0.0
    %284 = vmatprep.subr.mxu0 0.0
    %285 = vmatpush1.msra.mxu0 0.0
    %286 = vmatprep.subr.mxu0 0.0
    %287 = vmatpush1.msra.mxu0 0.0
    %288 = vmatprep.subr.mxu0 0.0
    %289 = vmatpush1.msra.mxu0 0.0
    %290 = vmatprep.subr.mxu0 0.0
    %291 = vmatpush1.msra.mxu0 0.0
    %292 = vmatprep.subr.mxu0 0.0
    %293 = vmatpush1.msra.mxu0 0.0
    %294 = vmatprep.subr.mxu0 0.0
    %295 = vmatpush1.msra.mxu0 0.0
    %296 = vmatprep.subr.mxu0 0.0
    %297 = vmatpush1.msra.mxu0 0.0
    %298 = vmatprep.subr.mxu0 0.0
    %299 = vmatpush1.msra.mxu0 0.0
    %300 = vmatprep.subr.mxu0 0.0
    %301 = vmatpush1.msra.mxu0 0.0
    %302 = vmatprep.subr.mxu0 0.0
    %303 = vmatpush1.msra.mxu0 0.0
    %304 = vmatprep.subr.mxu0 0.0
    %305 = vmatpush1.msra.mxu0 0.0
    %306 = vmatprep.subr.mxu0 0.0
    %307 = vmatpush1.msra.mxu0 0.0
    %308 = vmatprep.subr.mxu0 0.0
    %309 = vmatpush1.msra.mxu0 0.0
    %310 = vmatprep.subr.mxu0 0.0
    %311 = vmatpush1.msra.mxu0 0.0
    %312 = vmatprep.subr.mxu0 0.0
    %313 = vmatpush1.msra.mxu0 0.0
    %314 = vmatprep.subr.mxu0 0.0
    %315 = vmatpush1.msra.mxu0 0.0
    %316 = vmatprep.subr.mxu0 0.0
    %317 = vmatpush1.msra.mxu0 0.0
    %318 = vmatprep.subr.mxu0 0.0
    %319 = vmatpush1.msra.mxu0 0.0
    %320 = vmatprep.subr.mxu0 0.0
    %321 = vmatpush1.msra.mxu0 0.0
    %322 = vmatprep.subr.mxu0 0.0
    %323 = vmatpush1.msra.mxu0 0.0
    %324 = vmatprep.subr.mxu0 0.0
    %325 = vmatpush1.msra.mxu0 0.0
    %326 = vmatprep.subr.mxu0 0.0
    %327 = vmatpush1.msra.mxu0 0.0
    %328 = vmatprep.subr.mxu0 0.0
    %329 = vmatpush1.msra.mxu0 0.0
    %330 = vmatprep.mubr.f32.mxu0 0.0
    %331 = vmatmul.mubr.f32.gmra.mrb[0].mxu0 %v264
    %v332 = vpop.f32.mrb[0].mxu0
    %v333 = vadd.f32 0.0, %v332
    %v334 = vpop.f32.mrb[0].mxu0
    %v335 = vadd.f32 0.0, %v334
    %336 = vdwg.mxu0
    %v339 = vrot.slane %v333, 6
    %v340 = vrot.slane %v335, 6
    %v343 = vadd.f32 %v137, %v339
    %v344 = vadd.f32 %v139, %v340
    %v345 = vxor.u32 %v343, 2147483648
    %v346 = vmul.f32 %v345, 1.442695
    %v347 = vpow.pop %v346
    %v348 = vadd.f32 %v347, 1.0
    %v349 = vrcp.pop %v348
    %v350 = vmul.f32 1.0, %v349
    %v351 = vtanh.pop %v344
    %v352 = vxor.u32 %v344, 2147483648
    %v353 = vmul.f32 %v352, 1.442695
    %v354 = vpow.pop %v353
    %v355 = vadd.f32 %v354, 1.0
    %v356 = vrcp.pop %v355
    %v357 = vmul.f32 1.0, %v356
    %v359 = vrot.slane %v258, 6
    %v361 = vmul.f32 %v350, %v359
    %v362 = vmul.f32 %v350, %v351
    %364 = vrot.lane.b32.xlu0 %v362, 64
    %v365 = vpop.permute.xlu0 %364
    %v367 = vadd.f32 %v361, %v365
    %v368 = vtanh.pop %v367
    %v369 = vmul.f32 %v357, %v368
    %v371 = vrot.slane %v369, 2
    %372 = vrot.lane.b32.xlu0 %v371, 64
    %v373 = vpop.permute.xlu0 %372
    %v374 = vsel %vm63, %v373, 0
    %376 = vmatprep.subr.mxu0 %v148
    %377 = vmatpush1.msra.mxu0 %v147
    %378 = vmatprep.subr.mxu0 %v150
    %379 = vmatpush1.msra.mxu0 %v149
    %380 = vmatprep.subr.mxu0 %v152
    %381 = vmatpush1.msra.mxu0 %v151
    %382 = vmatprep.subr.mxu0 %v154
    %383 = vmatpush1.msra.mxu0 %v153
    %384 = vmatprep.subr.mxu0 %v156
    %385 = vmatpush1.msra.mxu0 %v155
    %386 = vmatprep.subr.mxu0 %v158
    %387 = vmatpush1.msra.mxu0 %v157
    %388 = vmatprep.subr.mxu0 %v160
    %389 = vmatpush1.msra.mxu0 %v159
    %390 = vmatprep.subr.mxu0 %v162
    %391 = vmatpush1.msra.mxu0 %v161
    %392 = vmatprep.subr.mxu0 0.0
    %393 = vmatpush1.msra.mxu0 0.0
    %394 = vmatprep.subr.mxu0 0.0
    %395 = vmatpush1.msra.mxu0 0.0
    %396 = vmatprep.subr.mxu0 0.0
    %397 = vmatpush1.msra.mxu0 0.0
    %398 = vmatprep.subr.mxu0 0.0
    %399 = vmatpush1.msra.mxu0 0.0
    %400 = vmatprep.subr.mxu0 0.0
    %401 = vmatpush1.msra.mxu0 0.0
    %402 = vmatprep.subr.mxu0 0.0
    %403 = vmatpush1.msra.mxu0 0.0
    %404 = vmatprep.subr.mxu0 0.0
    %405 = vmatpush1.msra.mxu0 0.0
    %406 = vmatprep.subr.mxu0 0.0
    %407 = vmatpush1.msra.mxu0 0.0
    %408 = vmatprep.subr.mxu0 0.0
    %409 = vmatpush1.msra.mxu0 0.0
    %410 = vmatprep.subr.mxu0 0.0
    %411 = vmatpush1.msra.mxu0 0.0
    %412 = vmatprep.subr.mxu0 0.0
    %413 = vmatpush1.msra.mxu0 0.0
    %414 = vmatprep.subr.mxu0 0.0
    %415 = vmatpush1.msra.mxu0 0.0
    %416 = vmatprep.subr.mxu0 0.0
    %417 = vmatpush1.msra.mxu0 0.0
    %418 = vmatprep.subr.mxu0 0.0
    %419 = vmatpush1.msra.mxu0 0.0
    %420 = vmatprep.subr.mxu0 0.0
    %421 = vmatpush1.msra.mxu0 0.0
    %422 = vmatprep.subr.mxu0 0.0
    %423 = vmatpush1.msra.mxu0 0.0
    %424 = vmatprep.subr.mxu0 0.0
    %425 = vmatpush1.msra.mxu0 0.0
    %426 = vmatprep.subr.mxu0 0.0
    %427 = vmatpush1.msra.mxu0 0.0
    %428 = vmatprep.subr.mxu0 0.0
    %429 = vmatpush1.msra.mxu0 0.0
    %430 = vmatprep.subr.mxu0 0.0
    %431 = vmatpush1.msra.mxu0 0.0
    %432 = vmatprep.subr.mxu0 0.0
    %433 = vmatpush1.msra.mxu0 0.0
    %434 = vmatprep.subr.mxu0 0.0
    %435 = vmatpush1.msra.mxu0 0.0
    %436 = vmatprep.subr.mxu0 0.0
    %437 = vmatpush1.msra.mxu0 0.0
    %438 = vmatprep.subr.mxu0 0.0
    %439 = vmatpush1.msra.mxu0 0.0
    %440 = vmatprep.mubr.f32.mxu0 0.0
    %441 = vmatmul.mubr.f32.gmra.mrb[0].mxu0 %v374
    %v442 = vpop.f32.mrb[0].mxu0
    %v443 = vadd.f32 0.0, %v442
    %v444 = vpop.f32.mrb[0].mxu0
    %v445 = vadd.f32 0.0, %v444
    %446 = vdwg.mxu0
    %v449 = vrot.slane %v443, 4
    %v450 = vrot.slane %v445, 4
    %v453 = vadd.f32 %v137, %v449
    %v454 = vadd.f32 %v139, %v450
    %v455 = vxor.u32 %v453, 2147483648
    %v456 = vmul.f32 %v455, 1.442695
    %v457 = vpow.pop %v456
    %v458 = vadd.f32 %v457, 1.0
    %v459 = vrcp.pop %v458
    %v460 = vmul.f32 1.0, %v459
    %v461 = vtanh.pop %v454
    %v462 = vxor.u32 %v454, 2147483648
    %v463 = vmul.f32 %v462, 1.442695
    %v464 = vpow.pop %v463
    %v465 = vadd.f32 %v464, 1.0
    %v466 = vrcp.pop %v465
    %v467 = vmul.f32 1.0, %v466
    %v469 = vrot.slane %v367, 6
    %v471 = vmul.f32 %v460, %v469
    %v472 = vmul.f32 %v460, %v461
    %474 = vrot.lane.b32.xlu0 %v472, 64
    %v475 = vpop.permute.xlu0 %474
    %v477 = vadd.f32 %v471, %v475
    %v478 = vtanh.pop %v477
    %v479 = vmul.f32 %v467, %v478
    %v481 = vrot.slane %v479, 4
    %482 = vrot.lane.b32.xlu0 %v481, 64
    %v483 = vpop.permute.xlu0 %482
    %v484 = vsel %vm63, %v483, 0
    %486 = vmatprep.subr.mxu0 %v148
    %487 = vmatpush1.msra.mxu0 %v147
    %488 = vmatprep.subr.mxu0 %v150
    %489 = vmatpush1.msra.mxu0 %v149
    %490 = vmatprep.subr.mxu0 %v152
    %491 = vmatpush1.msra.mxu0 %v151
    %492 = vmatprep.subr.mxu0 %v154
    %493 = vmatpush1.msra.mxu0 %v153
    %494 = vmatprep.subr.mxu0 %v156
    %495 = vmatpush1.msra.mxu0 %v155
    %496 = vmatprep.subr.mxu0 %v158
    %497 = vmatpush1.msra.mxu0 %v157
    %498 = vmatprep.subr.mxu0 %v160
    %499 = vmatpush1.msra.mxu0 %v159
    %500 = vmatprep.subr.mxu0 %v162
    %501 = vmatpush1.msra.mxu0 %v161
    %502 = vmatprep.subr.mxu0 0.0
    %503 = vmatpush1.msra.mxu0 0.0
    %504 = vmatprep.subr.mxu0 0.0
    %505 = vmatpush1.msra.mxu0 0.0
    %506 = vmatprep.subr.mxu0 0.0
    %507 = vmatpush1.msra.mxu0 0.0
    %508 = vmatprep.subr.mxu0 0.0
    %509 = vmatpush1.msra.mxu0 0.0
    %510 = vmatprep.subr.mxu0 0.0
    %511 = vmatpush1.msra.mxu0 0.0
    %512 = vmatprep.subr.mxu0 0.0
    %513 = vmatpush1.msra.mxu0 0.0
    %514 = vmatprep.subr.mxu0 0.0
    %515 = vmatpush1.msra.mxu0 0.0
    %516 = vmatprep.subr.mxu0 0.0
    %517 = vmatpush1.msra.mxu0 0.0
    %518 = vmatprep.subr.mxu0 0.0
    %519 = vmatpush1.msra.mxu0 0.0
    %520 = vmatprep.subr.mxu0 0.0
    %521 = vmatpush1.msra.mxu0 0.0
    %522 = vmatprep.subr.mxu0 0.0
    %523 = vmatpush1.msra.mxu0 0.0
    %524 = vmatprep.subr.mxu0 0.0
    %525 = vmatpush1.msra.mxu0 0.0
    %526 = vmatprep.subr.mxu0 0.0
    %527 = vmatpush1.msra.mxu0 0.0
    %528 = vmatprep.subr.mxu0 0.0
    %529 = vmatpush1.msra.mxu0 0.0
    %530 = vmatprep.subr.mxu0 0.0
    %531 = vmatpush1.msra.mxu0 0.0
    %532 = vmatprep.subr.mxu0 0.0
    %533 = vmatpush1.msra.mxu0 0.0
    %534 = vmatprep.subr.mxu0 0.0
    %535 = vmatpush1.msra.mxu0 0.0
    %536 = vmatprep.subr.mxu0 0.0
    %537 = vmatpush1.msra.mxu0 0.0
    %538 = vmatprep.subr.mxu0 0.0
    %539 = vmatpush1.msra.mxu0 0.0
    %540 = vmatprep.subr.mxu0 0.0
    %541 = vmatpush1.msra.mxu0 0.0
    %542 = vmatprep.subr.mxu0 0.0
    %543 = vmatpush1.msra.mxu0 0.0
    %544 = vmatprep.subr.mxu0 0.0
    %545 = vmatpush1.msra.mxu0 0.0
    %546 = vmatprep.subr.mxu0 0.0
    %547 = vmatpush1.msra.mxu0 0.0
    %548 = vmatprep.subr.mxu0 0.0
    %549 = vmatpush1.msra.mxu0 0.0
    %550 = vmatprep.mubr.f32.mxu0 0.0
    %551 = vmatmul.mubr.f32.gmra.mrb[0].mxu0 %v484
    %v552 = vpop.f32.mrb[0].mxu0
    %v553 = vadd.f32 0.0, %v552
    %v554 = vpop.f32.mrb[0].mxu0
    %v555 = vadd.f32 0.0, %v554
    %556 = vdwg.mxu0
    %v559 = vrot.slane %v553, 2
    %v560 = vrot.slane %v555, 2
    %v563 = vadd.f32 %v137, %v559
    %v564 = vadd.f32 %v139, %v560
    %v565 = vxor.u32 %v563, 2147483648
    %v566 = vmul.f32 %v565, 1.442695
    %v567 = vpow.pop %v566
    %v568 = vadd.f32 %v567, 1.0
    %v569 = vrcp.pop %v568
    %v570 = vmul.f32 1.0, %v569
    %v571 = vtanh.pop %v564
    %v572 = vxor.u32 %v564, 2147483648
    %v573 = vmul.f32 %v572, 1.442695
    %v574 = vpow.pop %v573
    %v575 = vadd.f32 %v574, 1.0
    %v576 = vrcp.pop %v575
    %v577 = vmul.f32 1.0, %v576
    %v579 = vrot.slane %v477, 6
    %v581 = vmul.f32 %v570, %v579
    %v582 = vmul.f32 %v570, %v571
    %584 = vrot.lane.b32.xlu0 %v582, 64
    %v585 = vpop.permute.xlu0 %584
    %v587 = vadd.f32 %v581, %v585
    %v588 = vtanh.pop %v587
    %v589 = vmul.f32 %v577, %v588
    %v591 = vrot.slane %v589, 6
    %592 = vrot.lane.b32.xlu0 %v591, 64
    %v593 = vpop.permute.xlu0 %592
    %v594 = vsel %vm63, %v593, 0
    %596 = vmatprep.subr.mxu0 %v148
    %597 = vmatpush1.msra.mxu0 %v147
    %598 = vmatprep.subr.mxu0 %v150
    %599 = vmatpush1.msra.mxu0 %v149
    %600 = vmatprep.subr.mxu0 %v152
    %601 = vmatpush1.msra.mxu0 %v151
    %602 = vmatprep.subr.mxu0 %v154
    %603 = vmatpush1.msra.mxu0 %v153
    %604 = vmatprep.subr.mxu0 %v156
    %605 = vmatpush1.msra.mxu0 %v155
    %606 = vmatprep.subr.mxu0 %v158
    %607 = vmatpush1.msra.mxu0 %v157
    %608 = vmatprep.subr.mxu0 %v160
    %609 = vmatpush1.msra.mxu0 %v159
    %610 = vmatprep.subr.mxu0 %v162
    %611 = vmatpush1.msra.mxu0 %v161
    %612 = vmatprep.subr.mxu0 0.0
    %613 = vmatpush1.msra.mxu0 0.0
    %614 = vmatprep.subr.mxu0 0.0
    %615 = vmatpush1.msra.mxu0 0.0
    %616 = vmatprep.subr.mxu0 0.0
    %617 = vmatpush1.msra.mxu0 0.0
    %618 = vmatprep.subr.mxu0 0.0
    %619 = vmatpush1.msra.mxu0 0.0
    %620 = vmatprep.subr.mxu0 0.0
    %621 = vmatpush1.msra.mxu0 0.0
    %622 = vmatprep.subr.mxu0 0.0
    %623 = vmatpush1.msra.mxu0 0.0
    %624 = vmatprep.subr.mxu0 0.0
    %625 = vmatpush1.msra.mxu0 0.0
    %626 = vmatprep.subr.mxu0 0.0
    %627 = vmatpush1.msra.mxu0 0.0
    %628 = vmatprep.subr.mxu0 0.0
    %629 = vmatpush1.msra.mxu0 0.0
    %630 = vmatprep.subr.mxu0 0.0
    %631 = vmatpush1.msra.mxu0 0.0
    %632 = vmatprep.subr.mxu0 0.0
    %633 = vmatpush1.msra.mxu0 0.0
    %634 = vmatprep.subr.mxu0 0.0
    %635 = vmatpush1.msra.mxu0 0.0
    %636 = vmatprep.subr.mxu0 0.0
    %637 = vmatpush1.msra.mxu0 0.0
    %638 = vmatprep.subr.mxu0 0.0
    %639 = vmatpush1.msra.mxu0 0.0
    %640 = vmatprep.subr.mxu0 0.0
    %641 = vmatpush1.msra.mxu0 0.0
    %642 = vmatprep.subr.mxu0 0.0
    %643 = vmatpush1.msra.mxu0 0.0
    %644 = vmatprep.subr.mxu0 0.0
    %645 = vmatpush1.msra.mxu0 0.0
    %646 = vmatprep.subr.mxu0 0.0
    %647 = vmatpush1.msra.mxu0 0.0
    %648 = vmatprep.subr.mxu0 0.0
    %649 = vmatpush1.msra.mxu0 0.0
    %650 = vmatprep.subr.mxu0 0.0
    %651 = vmatpush1.msra.mxu0 0.0
    %652 = vmatprep.subr.mxu0 0.0
    %653 = vmatpush1.msra.mxu0 0.0
    %654 = vmatprep.subr.mxu0 0.0
    %655 = vmatpush1.msra.mxu0 0.0
    %656 = vmatprep.subr.mxu0 0.0
    %657 = vmatpush1.msra.mxu0 0.0
    %658 = vmatprep.subr.mxu0 0.0
    %659 = vmatpush1.msra.mxu0 0.0
    %660 = vmatprep.mubr.f32.mxu0 0.0
    %661 = vmatmul.mubr.f32.gmra.mrb[0].mxu0 %v594
    %v662 = vpop.f32.mrb[0].mxu0
    %v663 = vadd.f32 0.0, %v662
    %v664 = vpop.f32.mrb[0].mxu0
    %v665 = vadd.f32 0.0, %v664
    %666 = vdwg.mxu0
    %v667 = vadd.f32 %v143, %v663
    %v668 = vadd.f32 %v145, %v665
    %v669 = vxor.u32 %v667, 2147483648
    %v670 = vmul.f32 %v669, 1.442695
    %v671 = vpow.pop %v670
    %v672 = vadd.f32 %v671, 1.0
    %v673 = vrcp.pop %v672
    %v674 = vmul.f32 1.0, %v673
    %v675 = vtanh.pop %v668
    %v676 = vxor.u32 %v668, 2147483648
    %v677 = vmul.f32 %v676, 1.442695
    %v678 = vpow.pop %v677
    %v679 = vadd.f32 %v678, 1.0
    %v680 = vrcp.pop %v679
    %v681 = vmul.f32 1.0, %v680
    %v683 = vrot.slane %v587, 6
    %v685 = vmul.f32 %v674, %v683
    %v686 = vmul.f32 %v674, %v675
    %688 = vrot.lane.b32.xlu0 %v686, 64
    %v689 = vpop.permute.xlu0 %688
    %v691 = vadd.f32 %v685, %v689
    %v692 = vtanh.pop %v691
    %v693 = vmul.f32 %v681, %v692
    %695 = vrot.lane.b32.xlu0 %v693, 64
    %v696 = vpop.permute.xlu0 %695
    %v697 = vsel %vm63, %v696, 0
    %699 = vmatprep.subr.mxu0 %v148
    %700 = vmatpush1.msra.mxu0 %v147
    %701 = vmatprep.subr.mxu0 %v150
    %702 = vmatpush1.msra.mxu0 %v149
    %703 = vmatprep.subr.mxu0 %v152
    %704 = vmatpush1.msra.mxu0 %v151
    %705 = vmatprep.subr.mxu0 %v154
    %706 = vmatpush1.msra.mxu0 %v153
    %707 = vmatprep.subr.mxu0 %v156
    %708 = vmatpush1.msra.mxu0 %v155
    %709 = vmatprep.subr.mxu0 %v158
    %710 = vmatpush1.msra.mxu0 %v157
    %711 = vmatprep.subr.mxu0 %v160
    %712 = vmatpush1.msra.mxu0 %v159
    %713 = vmatprep.subr.mxu0 %v162
    %714 = vmatpush1.msra.mxu0 %v161
    %715 = vmatprep.subr.mxu0 0.0
    %716 = vmatpush1.msra.mxu0 0.0
    %717 = vmatprep.subr.mxu0 0.0
    %718 = vmatpush1.msra.mxu0 0.0
    %719 = vmatprep.subr.mxu0 0.0
    %720 = vmatpush1.msra.mxu0 0.0
    %721 = vmatprep.subr.mxu0 0.0
    %722 = vmatpush1.msra.mxu0 0.0
    %723 = vmatprep.subr.mxu0 0.0
    %724 = vmatpush1.msra.mxu0 0.0
    %725 = vmatprep.subr.mxu0 0.0
    %726 = vmatpush1.msra.mxu0 0.0
    %727 = vmatprep.subr.mxu0 0.0
    %728 = vmatpush1.msra.mxu0 0.0
    %729 = vmatprep.subr.mxu0 0.0
    %730 = vmatpush1.msra.mxu0 0.0
    %731 = vmatprep.subr.mxu0 0.0
    %732 = vmatpush1.msra.mxu0 0.0
    %733 = vmatprep.subr.mxu0 0.0
    %734 = vmatpush1.msra.mxu0 0.0
    %735 = vmatprep.subr.mxu0 0.0
    %736 = vmatpush1.msra.mxu0 0.0
    %737 = vmatprep.subr.mxu0 0.0
    %738 = vmatpush1.msra.mxu0 0.0
    %739 = vmatprep.subr.mxu0 0.0
    %740 = vmatpush1.msra.mxu0 0.0
    %741 = vmatprep.subr.mxu0 0.0
    %742 = vmatpush1.msra.mxu0 0.0
    %743 = vmatprep.subr.mxu0 0.0
    %744 = vmatpush1.msra.mxu0 0.0
    %745 = vmatprep.subr.mxu0 0.0
    %746 = vmatpush1.msra.mxu0 0.0
    %747 = vmatprep.subr.mxu0 0.0
    %748 = vmatpush1.msra.mxu0 0.0
    %749 = vmatprep.subr.mxu0 0.0
    %750 = vmatpush1.msra.mxu0 0.0
    %751 = vmatprep.subr.mxu0 0.0
    %752 = vmatpush1.msra.mxu0 0.0
    %753 = vmatprep.subr.mxu0 0.0
    %754 = vmatpush1.msra.mxu0 0.0
    %755 = vmatprep.subr.mxu0 0.0
    %756 = vmatpush1.msra.mxu0 0.0
    %757 = vmatprep.subr.mxu0 0.0
    %758 = vmatpush1.msra.mxu0 0.0
    %759 = vmatprep.subr.mxu0 0.0
    %760 = vmatpush1.msra.mxu0 0.0
    %761 = vmatprep.subr.mxu0 0.0
    %762 = vmatpush1.msra.mxu0 0.0
    %763 = vmatprep.mubr.f32.mxu0 0.0
    %764 = vmatmul.mubr.f32.gmra.mrb[0].mxu0 %v697
    %v765 = vpop.f32.mrb[0].mxu0
    %v766 = vadd.f32 0.0, %v765
    %v767 = vpop.f32.mrb[0].mxu0
    %v768 = vadd.f32 0.0, %v767
    %769 = vdwg.mxu0
    %v772 = vrot.slane %v766, 6
    %v773 = vrot.slane %v768, 6
    %v776 = vadd.f32 %v143, %v772
    %v777 = vadd.f32 %v145, %v773
    %v778 = vxor.u32 %v776, 2147483648
    %v779 = vmul.f32 %v778, 1.442695
    %v780 = vpow.pop %v779
    %v781 = vadd.f32 %v780, 1.0
    %v782 = vrcp.pop %v781
    %v783 = vmul.f32 1.0, %v782
    %v784 = vtanh.pop %v777
    %v785 = vxor.u32 %v777, 2147483648
    %v786 = vmul.f32 %v785, 1.442695
    %v787 = vpow.pop %v786
    %v788 = vadd.f32 %v787, 1.0
    %v789 = vrcp.pop %v788
    %v790 = vmul.f32 1.0, %v789
    %v792 = vrot.slane %v691, 6
    %v794 = vmul.f32 %v783, %v792
    %v795 = vmul.f32 %v783, %v784
    %797 = vrot.lane.b32.xlu0 %v795, 64
    %v798 = vpop.permute.xlu0 %797
    %v800 = vadd.f32 %v794, %v798
    %v801 = vtanh.pop %v800
    %v802 = vmul.f32 %v790, %v801
    %v804 = vrot.slane %v802, 2
    %805 = vrot.lane.b32.xlu0 %v804, 64
    %v806 = vpop.permute.xlu0 %805
    %v807 = vsel %vm63, %v806, 0
    %809 = vmatprep.subr.mxu0 %v148
    %810 = vmatpush1.msra.mxu0 %v147
    %811 = vmatprep.subr.mxu0 %v150
    %812 = vmatpush1.msra.mxu0 %v149
    %813 = vmatprep.subr.mxu0 %v152
    %814 = vmatpush1.msra.mxu0 %v151
    %815 = vmatprep.subr.mxu0 %v154
    %816 = vmatpush1.msra.mxu0 %v153
    %817 = vmatprep.subr.mxu0 %v156
    %818 = vmatpush1.msra.mxu0 %v155
    %819 = vmatprep.subr.mxu0 %v158
    %820 = vmatpush1.msra.mxu0 %v157
    %821 = vmatprep.subr.mxu0 %v160
    %822 = vmatpush1.msra.mxu0 %v159
    %823 = vmatprep.subr.mxu0 %v162
    %824 = vmatpush1.msra.mxu0 %v161
    %825 = vmatprep.subr.mxu0 0.0
    %826 = vmatpush1.msra.mxu0 0.0
    %827 = vmatprep.subr.mxu0 0.0
    %828 = vmatpush1.msra.mxu0 0.0
    %829 = vmatprep.subr.mxu0 0.0
    %830 = vmatpush1.msra.mxu0 0.0
    %831 = vmatprep.subr.mxu0 0.0
    %832 = vmatpush1.msra.mxu0 0.0
    %833 = vmatprep.subr.mxu0 0.0
    %834 = vmatpush1.msra.mxu0 0.0
    %835 = vmatprep.subr.mxu0 0.0
    %836 = vmatpush1.msra.mxu0 0.0
    %837 = vmatprep.subr.mxu0 0.0
    %838 = vmatpush1.msra.mxu0 0.0
    %839 = vmatprep.subr.mxu0 0.0
    %840 = vmatpush1.msra.mxu0 0.0
    %841 = vmatprep.subr.mxu0 0.0
    %842 = vmatpush1.msra.mxu0 0.0
    %843 = vmatprep.subr.mxu0 0.0
    %844 = vmatpush1.msra.mxu0 0.0
    %845 = vmatprep.subr.mxu0 0.0
    %846 = vmatpush1.msra.mxu0 0.0
    %847 = vmatprep.subr.mxu0 0.0
    %848 = vmatpush1.msra.mxu0 0.0
    %849 = vmatprep.subr.mxu0 0.0
    %850 = vmatpush1.msra.mxu0 0.0
    %851 = vmatprep.subr.mxu0 0.0
    %852 = vmatpush1.msra.mxu0 0.0
    %853 = vmatprep.subr.mxu0 0.0
    %854 = vmatpush1.msra.mxu0 0.0
    %855 = vmatprep.subr.mxu0 0.0
    %856 = vmatpush1.msra.mxu0 0.0
    %857 = vmatprep.subr.mxu0 0.0
    %858 = vmatpush1.msra.mxu0 0.0
    %859 = vmatprep.subr.mxu0 0.0
    %860 = vmatpush1.msra.mxu0 0.0
    %861 = vmatprep.subr.mxu0 0.0
    %862 = vmatpush1.msra.mxu0 0.0
    %863 = vmatprep.subr.mxu0 0.0
    %864 = vmatpush1.msra.mxu0 0.0
    %865 = vmatprep.subr.mxu0 0.0
    %866 = vmatpush1.msra.mxu0 0.0
    %867 = vmatprep.subr.mxu0 0.0
    %868 = vmatpush1.msra.mxu0 0.0
    %869 = vmatprep.subr.mxu0 0.0
    %870 = vmatpush1.msra.mxu0 0.0
    %871 = vmatprep.subr.mxu0 0.0
    %872 = vmatpush1.msra.mxu0 0.0
    %873 = vmatprep.mubr.f32.mxu0 0.0
    %874 = vmatmul.mubr.f32.gmra.mrb[0].mxu0 %v807
    %v875 = vpop.f32.mrb[0].mxu0
    %v876 = vadd.f32 0.0, %v875
    %v877 = vpop.f32.mrb[0].mxu0
    %v878 = vadd.f32 0.0, %v877
    %879 = vdwg.mxu0
    %v882 = vrot.slane %v876, 4
    %v883 = vrot.slane %v878, 4
    %v886 = vadd.f32 %v143, %v882
    %v887 = vadd.f32 %v145, %v883
    %v888 = vxor.u32 %v886, 2147483648
    %v889 = vmul.f32 %v888, 1.442695
    %v890 = vpow.pop %v889
    %v891 = vadd.f32 %v890, 1.0
    %v892 = vrcp.pop %v891
    %v893 = vmul.f32 1.0, %v892
    %v894 = vtanh.pop %v887
    %v895 = vxor.u32 %v887, 2147483648
    %v896 = vmul.f32 %v895, 1.442695
    %v897 = vpow.pop %v896
    %v898 = vadd.f32 %v897, 1.0
    %v899 = vrcp.pop %v898
    %v900 = vmul.f32 1.0, %v899
    %v902 = vrot.slane %v800, 6
    %v904 = vmul.f32 %v893, %v902
    %v905 = vmul.f32 %v893, %v894
    %907 = vrot.lane.b32.xlu0 %v905, 64
    %v908 = vpop.permute.xlu0 %907
    %v910 = vadd.f32 %v904, %v908
    %v911 = vtanh.pop %v910
    %v912 = vmul.f32 %v900, %v911
    %v914 = vrot.slane %v912, 4
    %915 = vrot.lane.b32.xlu0 %v914, 64
    %v916 = vpop.permute.xlu0 %915
    %v917 = vsel %vm63, %v916, 0
    %919 = vmatprep.subr.mxu0 %v148
    %920 = vmatpush1.msra.mxu0 %v147
    %921 = vmatprep.subr.mxu0 %v150
    %922 = vmatpush1.msra.mxu0 %v149
    %923 = vmatprep.subr.mxu0 %v152
    %924 = vmatpush1.msra.mxu0 %v151
    %925 = vmatprep.subr.mxu0 %v154
    %926 = vmatpush1.msra.mxu0 %v153
    %927 = vmatprep.subr.mxu0 %v156
    %928 = vmatpush1.msra.mxu0 %v155
    %929 = vmatprep.subr.mxu0 %v158
    %930 = vmatpush1.msra.mxu0 %v157
    %931 = vmatprep.subr.mxu0 %v160
    %932 = vmatpush1.msra.mxu0 %v159
    %933 = vmatprep.subr.mxu0 %v162
    %934 = vmatpush1.msra.mxu0 %v161
    %935 = vmatprep.subr.mxu0 0.0
    %936 = vmatpush1.msra.mxu0 0.0
    %937 = vmatprep.subr.mxu0 0.0
    %938 = vmatpush1.msra.mxu0 0.0
    %939 = vmatprep.subr.mxu0 0.0
    %940 = vmatpush1.msra.mxu0 0.0
    %941 = vmatprep.subr.mxu0 0.0
    %942 = vmatpush1.msra.mxu0 0.0
    %943 = vmatprep.subr.mxu0 0.0
    %944 = vmatpush1.msra.mxu0 0.0
    %945 = vmatprep.subr.mxu0 0.0
    %946 = vmatpush1.msra.mxu0 0.0
    %947 = vmatprep.subr.mxu0 0.0
    %948 = vmatpush1.msra.mxu0 0.0
    %949 = vmatprep.subr.mxu0 0.0
    %950 = vmatpush1.msra.mxu0 0.0
    %951 = vmatprep.subr.mxu0 0.0
    %952 = vmatpush1.msra.mxu0 0.0
    %953 = vmatprep.subr.mxu0 0.0
    %954 = vmatpush1.msra.mxu0 0.0
    %955 = vmatprep.subr.mxu0 0.0
    %956 = vmatpush1.msra.mxu0 0.0
    %957 = vmatprep.subr.mxu0 0.0
    %958 = vmatpush1.msra.mxu0 0.0
    %959 = vmatprep.subr.mxu0 0.0
    %960 = vmatpush1.msra.mxu0 0.0
    %961 = vmatprep.subr.mxu0 0.0
    %962 = vmatpush1.msra.mxu0 0.0
    %963 = vmatprep.subr.mxu0 0.0
    %964 = vmatpush1.msra.mxu0 0.0
    %965 = vmatprep.subr.mxu0 0.0
    %966 = vmatpush1.msra.mxu0 0.0
    %967 = vmatprep.subr.mxu0 0.0
    %968 = vmatpush1.msra.mxu0 0.0
    %969 = vmatprep.subr.mxu0 0.0
    %970 = vmatpush1.msra.mxu0 0.0
    %971 = vmatprep.subr.mxu0 0.0
    %972 = vmatpush1.msra.mxu0 0.0
    %973 = vmatprep.subr.mxu0 0.0
    %974 = vmatpush1.msra.mxu0 0.0
    %975 = vmatprep.subr.mxu0 0.0
    %976 = vmatpush1.msra.mxu0 0.0
    %977 = vmatprep.subr.mxu0 0.0
    %978 = vmatpush1.msra.mxu0 0.0
    %979 = vmatprep.subr.mxu0 0.0
    %980 = vmatpush1.msra.mxu0 0.0
    %981 = vmatprep.subr.mxu0 0.0
    %982 = vmatpush1.msra.mxu0 0.0
    %983 = vmatprep.mubr.f32.mxu0 0.0
    %984 = vmatmul.mubr.f32.gmra.mrb[0].mxu0 %v917
    %v985 = vpop.f32.mrb[0].mxu0
    %v986 = vadd.f32 0.0, %v985
    %v987 = vpop.f32.mrb[0].mxu0
    %v988 = vadd.f32 0.0, %v987
    %989 = vdwg.mxu0
    %v992 = vrot.slane %v986, 2
    %v993 = vrot.slane %v988, 2
    %v996 = vadd.f32 %v143, %v992
    %v997 = vadd.f32 %v145, %v993
    %v998 = vxor.u32 %v996, 2147483648
    %v999 = vmul.f32 %v998, 1.442695
    %v1000 = vpow.pop %v999
    %v1001 = vadd.f32 %v1000, 1.0
    %v1002 = vrcp.pop %v1001
    %v1003 = vmul.f32 1.0, %v1002
    %v1004 = vtanh.pop %v997
    %v1005 = vxor.u32 %v997, 2147483648
    %v1006 = vmul.f32 %v1005, 1.442695
    %v1007 = vpow.pop %v1006
    %v1008 = vadd.f32 %v1007, 1.0
    %v1009 = vrcp.pop %v1008
    %v1010 = vmul.f32 1.0, %v1009
    %v1012 = vrot.slane %v910, 6
    %v1014 = vmul.f32 %v1003, %v1012
    %v1015 = vmul.f32 %v1003, %v1004
    %1017 = vrot.lane.b32.xlu0 %v1015, 64
    %v1018 = vpop.permute.xlu0 %1017
    %v1020 = vadd.f32 %v1014, %v1018
    %v1021 = vtanh.pop %v1020
    %v1022 = vmul.f32 %v1010, %v1021
    %v1025 = vrot.slane %v1022, 6
    %1026 = vrot.lane.b32.xlu0 %v1025, 64
    %v1027 = vpop.permute.xlu0 %1026
    %vm1029 = vcmask 261120
    %v1030 = vsel %vm1029, %v263, %v1027
    %1031 = vrot.lane.b32.xlu0 %v369, 64
    %v1032 = vpop.permute.xlu0 %1031
    %v1034 = vrot.slane %v912, 2
    %1035 = vrot.lane.b32.xlu0 %v1034, 64
    %v1036 = vpop.permute.xlu0 %1035
    %v1038 = vsel %vm1029, %v1032, %v1036
    %1039 = vrot.lane.b32.xlu0 %v479, 64
    %v1040 = vpop.permute.xlu0 %1039
    %v1042 = vrot.slane %v802, 6
    %1043 = vrot.lane.b32.xlu0 %v1042, 64
    %v1044 = vpop.permute.xlu0 %1043
    %v1046 = vsel %vm1029, %v1040, %v1044
    %1047 = vrot.lane.b32.xlu0 %v589, 64
    %v1048 = vpop.permute.xlu0 %1047
    %v1050 = vrot.slane %v693, 2
    %1051 = vrot.lane.b32.xlu0 %v1050, 64
    %v1052 = vpop.permute.xlu0 %1051
    %v1054 = vsel %vm1029, %v1048, %v1052
    %v1057 = vsel %vm1029, %v696, %v593
    %1058 = vrot.lane.b32.xlu0 %v802, 64
    %v1059 = vpop.permute.xlu0 %1058
    %v1061 = vrot.slane %v479, 2
    %1062 = vrot.lane.b32.xlu0 %v1061, 64
    %v1063 = vpop.permute.xlu0 %1062
    %v1065 = vsel %vm1029, %v1059, %v1063
    %1066 = vrot.lane.b32.xlu0 %v912, 64
    %v1067 = vpop.permute.xlu0 %1066
    %v1069 = vrot.slane %v369, 6
    %1070 = vrot.lane.b32.xlu0 %v1069, 64
    %v1071 = vpop.permute.xlu0 %1070
    %v1073 = vsel %vm1029, %v1067, %v1071
    %1074 = vrot.lane.b32.xlu0 %v1022, 64
    %v1075 = vpop.permute.xlu0 %1074
    %v1077 = vrot.slane %v260, 2
    %1078 = vrot.lane.b32.xlu0 %v1077, 64
    %v1079 = vpop.permute.xlu0 %1078
    %v1081 = vsel %vm1029, %v1075, %v1079
    %v1083 = vrot.slane %v1038, 1
    %v1086 = vrot.slane %v1046, 2
    %v1089 = vrot.slane %v1054, 3
    %v1092 = vrot.slane %v1057, 4
    %v1095 = vrot.slane %v1065, 5
    %v1098 = vrot.slane %v1073, 6
    %v1101 = vrot.slane %v1081, 7
    %v1104 = vrot.slane %v1030, 1
    %v1106 = vrot.slane %v1038, 2
    %v1108 = vrot.slane %v1046, 3
    %v1110 = vrot.slane %v1054, 4
    %v1112 = vrot.slane %v1057, 5
    %v1114 = vrot.slane %v1065, 6
    %v1116 = vrot.slane %v1073, 7
    %vm1118 = vcmask 1040384
    %v1119 = vsel %vm1118, %v1030, %v1083
    %vm1120 = vcmask 1041408
    %v1121 = vsel %vm1120, %v1119, %v1086
    %vm1122 = vcmask 1042432
    %v1123 = vsel %vm1122, %v1121, %v1089
    %vm1124 = vcmask 1043456
    %v1125 = vsel %vm1124, %v1123, %v1092
    %vm1126 = vcmask 1044480
    %v1127 = vsel %vm1126, %v1125, %v1095
    %vm1128 = vcmask 1045504
    %v1129 = vsel %vm1128, %v1127, %v1098
    %vm1130 = vcmask 1046528
    %v1131 = vsel %vm1130, %v1129, %v1101
    %v1132 = vsel %vm1118, %v1104, %v1106
    %v1133 = vsel %vm1120, %v1132, %v1108
    %v1134 = vsel %vm1122, %v1133, %v1110
    %v1135 = vsel %vm1124, %v1134, %v1112
    %v1136 = vsel %vm1126, %v1135, %v1114
    %v1137 = vsel %vm1128, %v1136, %v1116
    %v1138 = vsel %vm1130, %v1137, %v1081
    %v1139 = vld [vmem:[%s4] sm:$0xff]
    %v1140 = vld [vmem:[%s4 + $0x8] sm:$0xff]
    %v1141 = vld [vmem:[%s4 + $0x10] sm:$0xff]
    %v1142 = vld [vmem:[%s4 + $0x18] sm:$0xff]
    %v1143 = vld [vmem:[%s4 + $0x20] sm:$0xff]
    %v1144 = vld [vmem:[%s4 + $0x28] sm:$0xff]
    %v1145 = vld [vmem:[%s4 + $0x30] sm:$0xff]
    %v1146 = vld [vmem:[%s4 + $0x38] sm:$0xff]
    %v1147 = vld [vmem:[%s5] sm:$0x1]
    %v1149 = vlaneseq
    %v1150 = vshrl.u32 %v1149, 7
    %v1151 = vsub.s32 0, %v1150
    %v1152 = vrot.slane %v1147, %v1151
    %v1155 = vsel %vm63, %v1131, 0
    %v1158 = vsel %vm63, %v1138, 0
    %1160 = vmatprep.subr.mxu0 0.0
    %1161 = vmatpush1.msra.mxu0 %v1139
    %1162 = vmatprep.subr.mxu0 0.0
    %1163 = vmatpush1.msra.mxu0 %v1140
    %1164 = vmatprep.subr.mxu0 0.0
    %1165 = vmatpush1.msra.mxu0 %v1141
    %1166 = vmatprep.subr.mxu0 0.0
    %1167 = vmatpush1.msra.mxu0 %v1142
    %1168 = vmatprep.subr.mxu0 0.0
    %1169 = vmatpush1.msra.mxu0 %v1143
    %1170 = vmatprep.subr.mxu0 0.0
    %1171 = vmatpush1.msra.mxu0 %v1144
    %1172 = vmatprep.subr.mxu0 0.0
    %1173 = vmatpush1.msra.mxu0 %v1145
    %1174 = vmatprep.subr.mxu0 0.0
    %1175 = vmatpush1.msra.mxu0 %v1146
    %1176 = vmatprep.subr.mxu0 0.0
    %1177 = vmatpush1.msra.mxu0 0.0
    %1178 = vmatprep.subr.mxu0 0.0
    %1179 = vmatpush1.msra.mxu0 0.0
    %1180 = vmatprep.subr.mxu0 0.0
    %1181 = vmatpush1.msra.mxu0 0.0
    %1182 = vmatprep.subr.mxu0 0.0
    %1183 = vmatpush1.msra.mxu0 0.0
    %1184 = vmatprep.subr.mxu0 0.0
    %1185 = vmatpush1.msra.mxu0 0.0
    %1186 = vmatprep.subr.mxu0 0.0
    %1187 = vmatpush1.msra.mxu0 0.0
    %1188 = vmatprep.subr.mxu0 0.0
    %1189 = vmatpush1.msra.mxu0 0.0
    %1190 = vmatprep.subr.mxu0 0.0
    %1191 = vmatpush1.msra.mxu0 0.0
    %1192 = vmatprep.subr.mxu0 0.0
    %1193 = vmatpush1.msra.mxu0 0.0
    %1194 = vmatprep.subr.mxu0 0.0
    %1195 = vmatpush1.msra.mxu0 0.0
    %1196 = vmatprep.subr.mxu0 0.0
    %1197 = vmatpush1.msra.mxu0 0.0
    %1198 = vmatprep.subr.mxu0 0.0
    %1199 = vmatpush1.msra.mxu0 0.0
    %1200 = vmatprep.subr.mxu0 0.0
    %1201 = vmatpush1.msra.mxu0 0.0
    %1202 = vmatprep.subr.mxu0 0.0
    %1203 = vmatpush1.msra.mxu0 0.0
    %1204 = vmatprep.subr.mxu0 0.0
    %1205 = vmatpush1.msra.mxu0 0.0
    %1206 = vmatprep.subr.mxu0 0.0
    %1207 = vmatpush1.msra.mxu0 0.0
    %1208 = vmatprep.subr.mxu0 0.0
    %1209 = vmatpush1.msra.mxu0 0.0
    %1210 = vmatprep.subr.mxu0 0.0
    %1211 = vmatpush1.msra.mxu0 0.0
    %1212 = vmatprep.subr.mxu0 0.0
    %1213 = vmatpush1.msra.mxu0 0.0
    %1214 = vmatprep.subr.mxu0 0.0
    %1215 = vmatpush1.msra.mxu0 0.0
    %1216 = vmatprep.subr.mxu0 0.0
    %1217 = vmatpush1.msra.mxu0 0.0
    %1218 = vmatprep.subr.mxu0 0.0
    %1219 = vmatpush1.msra.mxu0 0.0
    %1220 = vmatprep.subr.mxu0 0.0
    %1221 = vmatpush1.msra.mxu0 0.0
    %1222 = vmatprep.subr.mxu0 0.0
    %1223 = vmatpush1.msra.mxu0 0.0
    %1224 = vmatprep.mubr.f32.mxu0 0.0
    %1225 = vmatmul.mubr.f32.gmra.mrb[0].mxu0 %v1155
    %v1226 = vpop.f32.mrb[0].mxu0
    %v1227 = vadd.f32 %v1152, %v1226
    %v1228 = vpop.f32.mrb[0].mxu0
    %1229 = vmatprep.mubr.f32.mxu0 0.0
    %1230 = vmatmul.mubr.f32.gmra.mrb[0].mxu0 %v1158
    %v1231 = vpop.f32.mrb[0].mxu0
    %v1232 = vadd.f32 %v1152, %v1231
    %v1233 = vpop.f32.mrb[0].mxu0
    %1234 = vdwg.mxu0
    %v1235 = vtanh.pop %v1227
    %v1236 = vtanh.pop %v1232
    %v1237 = vld [vmem:[%s6] sm:$0xff]
    %v1238 = vld [vmem:[%s6 + $0x8] sm:$0xff]
    %v1239 = vld [vmem:[%s6 + $0x10] sm:$0xff]
    %v1240 = vld [vmem:[%s6 + $0x18] sm:$0xff]
    %v1241 = vld [vmem:[%s6 + $0x20] sm:$0xff]
    %v1242 = vld [vmem:[%s6 + $0x28] sm:$0xff]
    %v1243 = vld [vmem:[%s6 + $0x30] sm:$0xff]
    %v1244 = vld [vmem:[%s6 + $0x38] sm:$0xff]
    %v1245 = vld [vmem:[%s6 + $0x40] sm:$0xff]
    %v1246 = vld [vmem:[%s6 + $0x48] sm:$0xff]
    %v1247 = vld [vmem:[%s6 + $0x50] sm:$0xff]
    %v1248 = vld [vmem:[%s6 + $0x58] sm:$0xff]
    %v1249 = vld [vmem:[%s6 + $0x60] sm:$0xff]
    %v1250 = vld [vmem:[%s6 + $0x68] sm:$0xff]
    %v1251 = vld [vmem:[%s6 + $0x70] sm:$0xff]
    %v1252 = vld [vmem:[%s6 + $0x78] sm:$0xff]
    %1253 = vmatprep.subr.mxu0 0.0
    %1254 = vmatpush1.msra.mxu0 %v1237
    %1255 = vmatprep.subr.mxu0 0.0
    %1256 = vmatpush1.msra.mxu0 %v1238
    %1257 = vmatprep.subr.mxu0 0.0
    %1258 = vmatpush1.msra.mxu0 %v1239
    %1259 = vmatprep.subr.mxu0 0.0
    %1260 = vmatpush1.msra.mxu0 %v1240
    %1261 = vmatprep.subr.mxu0 0.0
    %1262 = vmatpush1.msra.mxu0 %v1241
    %1263 = vmatprep.subr.mxu0 0.0
    %1264 = vmatpush1.msra.mxu0 %v1242
    %1265 = vmatprep.subr.mxu0 0.0
    %1266 = vmatpush1.msra.mxu0 %v1243
    %1267 = vmatprep.subr.mxu0 0.0
    %1268 = vmatpush1.msra.mxu0 %v1244
    %1269 = vmatprep.subr.mxu0 0.0
    %1270 = vmatpush1.msra.mxu0 %v1245
    %1271 = vmatprep.subr.mxu0 0.0
    %1272 = vmatpush1.msra.mxu0 %v1246
    %1273 = vmatprep.subr.mxu0 0.0
    %1274 = vmatpush1.msra.mxu0 %v1247
    %1275 = vmatprep.subr.mxu0 0.0
    %1276 = vmatpush1.msra.mxu0 %v1248
    %1277 = vmatprep.subr.mxu0 0.0
    %1278 = vmatpush1.msra.mxu0 %v1249
    %1279 = vmatprep.subr.mxu0 0.0
    %1280 = vmatpush1.msra.mxu0 %v1250
    %1281 = vmatprep.subr.mxu0 0.0
    %1282 = vmatpush1.msra.mxu0 %v1251
    %1283 = vmatprep.subr.mxu0 0.0
    %1284 = vmatpush1.msra.mxu0 %v1252
    %1285 = vmatprep.subr.mxu0 0.0
    %1286 = vmatpush1.msra.mxu0 0.0
    %1287 = vmatprep.subr.mxu0 0.0
    %1288 = vmatpush1.msra.mxu0 0.0
    %1289 = vmatprep.subr.mxu0 0.0
    %1290 = vmatpush1.msra.mxu0 0.0
    %1291 = vmatprep.subr.mxu0 0.0
    %1292 = vmatpush1.msra.mxu0 0.0
    %1293 = vmatprep.subr.mxu0 0.0
    %1294 = vmatpush1.msra.mxu0 0.0
    %1295 = vmatprep.subr.mxu0 0.0
    %1296 = vmatpush1.msra.mxu0 0.0
    %1297 = vmatprep.subr.mxu0 0.0
    %1298 = vmatpush1.msra.mxu0 0.0
    %1299 = vmatprep.subr.mxu0 0.0
    %1300 = vmatpush1.msra.mxu0 0.0
    %1301 = vmatprep.subr.mxu0 0.0
    %1302 = vmatpush1.msra.mxu0 0.0
    %1303 = vmatprep.subr.mxu0 0.0
    %1304 = vmatpush1.msra.mxu0 0.0
    %1305 = vmatprep.subr.mxu0 0.0
    %1306 = vmatpush1.msra.mxu0 0.0
    %1307 = vmatprep.subr.mxu0 0.0
    %1308 = vmatpush1.msra.mxu0 0.0
    %1309 = vmatprep.subr.mxu0 0.0
    %1310 = vmatpush1.msra.mxu0 0.0
    %1311 = vmatprep.subr.mxu0 0.0
    %1312 = vmatpush1.msra.mxu0 0.0
    %1313 = vmatprep.subr.mxu0 0.0
    %1314 = vmatpush1.msra.mxu0 0.0
    %1315 = vmatprep.subr.mxu0 0.0
    %1316 = vmatpush1.msra.mxu0 0.0
    %1317 = vmatprep.mubr.f32.mxu0 0.0
    %1318 = vmatmul.mubr.f32.gmra.mrb[0].mxu0 %v1235
    %v1319 = vpop.f32.mrb[0].mxu0
    %v1320 = vadd.f32 0.0, %v1319
    %v1321 = vpop.f32.mrb[0].mxu0
    %1322 = vmatprep.mubr.f32.mxu0 0.0
    %1323 = vmatmul.mubr.f32.gmra.mrb[0].mxu0 %v1236
    %v1324 = vpop.f32.mrb[0].mxu0
    %v1325 = vadd.f32 0.0, %v1324
    %v1326 = vpop.f32.mrb[0].mxu0
    %1327 = vdwg.mxu0
    %v1328 = vsel %vm1029, %v1320, -inf
    %v1329 = vrot.slane %v1328, 4
    %v1330 = vmax.f32 %v1328, %v1329
    %v1331 = vrot.slane %v1330, 2
    %v1332 = vmax.f32 %v1330, %v1331
    %v1333 = vrot.slane %v1332, 1
    %v1334 = vmax.f32 %v1332, %v1333
    %v1335 = vsel %vm1029, %v1325, -inf
    %v1336 = vrot.slane %v1335, 4
    %v1337 = vmax.f32 %v1335, %v1336
    %v1338 = vrot.slane %v1337, 2
    %v1339 = vmax.f32 %v1337, %v1338
    %v1340 = vrot.slane %v1339, 1
    %v1341 = vmax.f32 %v1339, %v1340
    %v1342 = vsub.f32 %v1320, %v1334
    %v1343 = vsub.f32 %v1325, %v1341
    %v1344 = vmul.f32 %v1342, 1.442695
    %v1345 = vpow.pop %v1344
    %v1346 = vmul.f32 %v1343, 1.442695
    %v1347 = vpow.pop %v1346
    %v1348 = vsel %vm1029, %v1345, 0.0
    %v1349 = vrot.slane %v1348, 4
    %v1350 = vadd.f32 %v1348, %v1349
    %v1351 = vrot.slane %v1350, 2
    %v1352 = vadd.f32 %v1350, %v1351
    %v1353 = vrot.slane %v1352, 1
    %v1354 = vadd.f32 %v1352, %v1353
    %v1355 = vsel %vm1029, %v1347, 0.0
    %v1356 = vrot.slane %v1355, 4
    %v1357 = vadd.f32 %v1355, %v1356
    %v1358 = vrot.slane %v1357, 2
    %v1359 = vadd.f32 %v1357, %v1358
    %v1360 = vrot.slane %v1359, 1
    %v1361 = vadd.f32 %v1359, %v1360
    %v1362 = vrcp.pop %v1354
    %v1363 = vrcp.pop %v1361
    %v1364 = vmul.f32 %v1345, %v1362
    %v1365 = vmul.f32 %v1347, %v1363
    %v1366 = vld [vmem:[%s7] sm:$0xff]
    %v1367 = vld [vmem:[%s7 + $0x8] sm:$0xff]
    %v1368 = vld [vmem:[%s7 + $0x10] sm:$0xff]
    %v1369 = vld [vmem:[%s7 + $0x18] sm:$0xff]
    %v1371 = vsel %vm1029, %v1364, 0
    %v1374 = vsel %vm1029, %v1365, 0
    %1376 = vmatprep.subr.mxu0 0.0
    %1377 = vmatpush1.msra.mxu0 %v1366
    %1378 = vmatprep.subr.mxu0 0.0
    %1379 = vmatpush1.msra.mxu0 %v1367
    %1380 = vmatprep.subr.mxu0 0.0
    %1381 = vmatpush1.msra.mxu0 %v1368
    %1382 = vmatprep.subr.mxu0 0.0
    %1383 = vmatpush1.msra.mxu0 %v1369
    %1384 = vmatprep.subr.mxu0 0.0
    %1385 = vmatpush1.msra.mxu0 0.0
    %1386 = vmatprep.subr.mxu0 0.0
    %1387 = vmatpush1.msra.mxu0 0.0
    %1388 = vmatprep.subr.mxu0 0.0
    %1389 = vmatpush1.msra.mxu0 0.0
    %1390 = vmatprep.subr.mxu0 0.0
    %1391 = vmatpush1.msra.mxu0 0.0
    %1392 = vmatprep.subr.mxu0 0.0
    %1393 = vmatpush1.msra.mxu0 0.0
    %1394 = vmatprep.subr.mxu0 0.0
    %1395 = vmatpush1.msra.mxu0 0.0
    %1396 = vmatprep.subr.mxu0 0.0
    %1397 = vmatpush1.msra.mxu0 0.0
    %1398 = vmatprep.subr.mxu0 0.0
    %1399 = vmatpush1.msra.mxu0 0.0
    %1400 = vmatprep.subr.mxu0 0.0
    %1401 = vmatpush1.msra.mxu0 0.0
    %1402 = vmatprep.subr.mxu0 0.0
    %1403 = vmatpush1.msra.mxu0 0.0
    %1404 = vmatprep.subr.mxu0 0.0
    %1405 = vmatpush1.msra.mxu0 0.0
    %1406 = vmatprep.subr.mxu0 0.0
    %1407 = vmatpush1.msra.mxu0 0.0
    %1408 = vmatprep.subr.mxu0 0.0
    %1409 = vmatpush1.msra.mxu0 0.0
    %1410 = vmatprep.subr.mxu0 0.0
    %1411 = vmatpush1.msra.mxu0 0.0
    %1412 = vmatprep.subr.mxu0 0.0
    %1413 = vmatpush1.msra.mxu0 0.0
    %1414 = vmatprep.subr.mxu0 0.0
    %1415 = vmatpush1.msra.mxu0 0.0
    %1416 = vmatprep.subr.mxu0 0.0
    %1417 = vmatpush1.msra.mxu0 0.0
    %1418 = vmatprep.subr.mxu0 0.0
    %1419 = vmatpush1.msra.mxu0 0.0
    %1420 = vmatprep.subr.mxu0 0.0
    %1421 = vmatpush1.msra.mxu0 0.0
    %1422 = vmatprep.subr.mxu0 0.0
    %1423 = vmatpush1.msra.mxu0 0.0
    %1424 = vmatprep.subr.mxu0 0.0
    %1425 = vmatpush1.msra.mxu0 0.0
    %1426 = vmatprep.subr.mxu0 0.0
    %1427 = vmatpush1.msra.mxu0 0.0
    %1428 = vmatprep.subr.mxu0 0.0
    %1429 = vmatpush1.msra.mxu0 0.0
    %1430 = vmatprep.subr.mxu0 0.0
    %1431 = vmatpush1.msra.mxu0 0.0
    %1432 = vmatprep.subr.mxu0 0.0
    %1433 = vmatpush1.msra.mxu0 0.0
    %1434 = vmatprep.subr.mxu0 0.0
    %1435 = vmatpush1.msra.mxu0 0.0
    %1436 = vmatprep.subr.mxu0 0.0
    %1437 = vmatpush1.msra.mxu0 0.0
    %1438 = vmatprep.subr.mxu0 0.0
    %1439 = vmatpush1.msra.mxu0 0.0
    %1440 = vmatprep.mubr.f32.mxu0 0.0
    %1441 = vmatmul.mubr.f32.gmra.mrb[0].mxu0 %v1371
    %v1442 = vpop.f32.mrb[0].mxu0
    %v1443 = vadd.f32 0.0, %v1442
    %v1444 = vpop.f32.mrb[0].mxu0
    %1445 = vmatprep.mubr.f32.mxu0 0.0
    %1446 = vmatmul.mubr.f32.gmra.mrb[0].mxu0 %v1374
    %v1447 = vpop.f32.mrb[0].mxu0
    %v1448 = vadd.f32 0.0, %v1447
    %v1449 = vpop.f32.mrb[0].mxu0
    %1450 = vdwg.mxu0
    %v1451 = vmul.f32 %v1131, %v1443
    %v1452 = vmul.f32 %v1138, %v1448
    %v1453 = vsel %vm63, %v1451, 0.0
    %1454 = vadd.xlane.f32.xlu0 %v1453
    %v1455 = vpop.xlane.xlu0 %1454
    %v1456 = vsel %vm63, %v1452, 0.0
    %1457 = vadd.xlane.f32.xlu0 %v1456
    %v1458 = vpop.xlane.xlu0 %1457
    %v1459 = vrot.slane %v1455, 4
    %v1460 = vadd.f32 %v1455, %v1459
    %v1461 = vrot.slane %v1460, 2
    %v1462 = vadd.f32 %v1460, %v1461
    %v1463 = vrot.slane %v1462, 1
    %v1464 = vadd.f32 %v1462, %v1463
    %v1465 = vrot.slane %v1458, 4
    %v1466 = vadd.f32 %v1458, %v1465
    %v1467 = vrot.slane %v1466, 2
    %v1468 = vadd.f32 %v1466, %v1467
    %v1469 = vrot.slane %v1468, 1
    %v1470 = vadd.f32 %v1468, %v1469
    %s1471 = scalar_lea.vmem %s7, 32
    %v1472 = vld [vmem:[%s1471] sm:$0xff]
    %v1473 = vld [vmem:[%s1471 + $0x8] sm:$0xff]
    %v1474 = vld [vmem:[%s1471 + $0x10] sm:$0xff]
    %v1475 = vld [vmem:[%s1471 + $0x18] sm:$0xff]
    %1476 = vmatprep.subr.mxu0 0.0
    %1477 = vmatpush1.msra.mxu0 %v1472
    %1478 = vmatprep.subr.mxu0 0.0
    %1479 = vmatpush1.msra.mxu0 %v1473
    %1480 = vmatprep.subr.mxu0 0.0
    %1481 = vmatpush1.msra.mxu0 %v1474
    %1482 = vmatprep.subr.mxu0 0.0
    %1483 = vmatpush1.msra.mxu0 %v1475
    %1484 = vmatprep.subr.mxu0 0.0
    %1485 = vmatpush1.msra.mxu0 0.0
    %1486 = vmatprep.subr.mxu0 0.0
    %1487 = vmatpush1.msra.mxu0 0.0
    %1488 = vmatprep.subr.mxu0 0.0
    %1489 = vmatpush1.msra.mxu0 0.0
    %1490 = vmatprep.subr.mxu0 0.0
    %1491 = vmatpush1.msra.mxu0 0.0
    %1492 = vmatprep.subr.mxu0 0.0
    %1493 = vmatpush1.msra.mxu0 0.0
    %1494 = vmatprep.subr.mxu0 0.0
    %1495 = vmatpush1.msra.mxu0 0.0
    %1496 = vmatprep.subr.mxu0 0.0
    %1497 = vmatpush1.msra.mxu0 0.0
    %1498 = vmatprep.subr.mxu0 0.0
    %1499 = vmatpush1.msra.mxu0 0.0
    %1500 = vmatprep.subr.mxu0 0.0
    %1501 = vmatpush1.msra.mxu0 0.0
    %1502 = vmatprep.subr.mxu0 0.0
    %1503 = vmatpush1.msra.mxu0 0.0
    %1504 = vmatprep.subr.mxu0 0.0
    %1505 = vmatpush1.msra.mxu0 0.0
    %1506 = vmatprep.subr.mxu0 0.0
    %1507 = vmatpush1.msra.mxu0 0.0
    %1508 = vmatprep.subr.mxu0 0.0
    %1509 = vmatpush1.msra.mxu0 0.0
    %1510 = vmatprep.subr.mxu0 0.0
    %1511 = vmatpush1.msra.mxu0 0.0
    %1512 = vmatprep.subr.mxu0 0.0
    %1513 = vmatpush1.msra.mxu0 0.0
    %1514 = vmatprep.subr.mxu0 0.0
    %1515 = vmatpush1.msra.mxu0 0.0
    %1516 = vmatprep.subr.mxu0 0.0
    %1517 = vmatpush1.msra.mxu0 0.0
    %1518 = vmatprep.subr.mxu0 0.0
    %1519 = vmatpush1.msra.mxu0 0.0
    %1520 = vmatprep.subr.mxu0 0.0
    %1521 = vmatpush1.msra.mxu0 0.0
    %1522 = vmatprep.subr.mxu0 0.0
    %1523 = vmatpush1.msra.mxu0 0.0
    %1524 = vmatprep.subr.mxu0 0.0
    %1525 = vmatpush1.msra.mxu0 0.0
    %1526 = vmatprep.subr.mxu0 0.0
    %1527 = vmatpush1.msra.mxu0 0.0
    %1528 = vmatprep.subr.mxu0 0.0
    %1529 = vmatpush1.msra.mxu0 0.0
    %1530 = vmatprep.subr.mxu0 0.0
    %1531 = vmatpush1.msra.mxu0 0.0
    %1532 = vmatprep.subr.mxu0 0.0
    %1533 = vmatpush1.msra.mxu0 0.0
    %1534 = vmatprep.subr.mxu0 0.0
    %1535 = vmatpush1.msra.mxu0 0.0
    %1536 = vmatprep.subr.mxu0 0.0
    %1537 = vmatpush1.msra.mxu0 0.0
    %1538 = vmatprep.subr.mxu0 0.0
    %1539 = vmatpush1.msra.mxu0 0.0
    %1540 = vmatprep.mubr.f32.mxu0 0.0
    %1541 = vmatmul.mubr.f32.gmra.mrb[0].mxu0 %v1371
    %v1542 = vpop.f32.mrb[0].mxu0
    %v1543 = vadd.f32 0.0, %v1542
    %v1544 = vpop.f32.mrb[0].mxu0
    %1545 = vmatprep.mubr.f32.mxu0 0.0
    %1546 = vmatmul.mubr.f32.gmra.mrb[0].mxu0 %v1374
    %v1547 = vpop.f32.mrb[0].mxu0
    %v1548 = vadd.f32 0.0, %v1547
    %v1549 = vpop.f32.mrb[0].mxu0
    %1550 = vdwg.mxu0
    %v1551 = vmul.f32 %v1131, %v1543
    %v1552 = vmul.f32 %v1138, %v1548
    %v1553 = vsel %vm63, %v1551, 0.0
    %1554 = vadd.xlane.f32.xlu0 %v1553
    %v1555 = vpop.xlane.xlu0 %1554
    %v1556 = vsel %vm63, %v1552, 0.0
    %1557 = vadd.xlane.f32.xlu0 %v1556
    %v1558 = vpop.xlane.xlu0 %1557
    %v1559 = vrot.slane %v1555, 4
    %v1560 = vadd.f32 %v1555, %v1559
    %v1561 = vrot.slane %v1560, 2
    %v1562 = vadd.f32 %v1560, %v1561
    %v1563 = vrot.slane %v1562, 1
    %v1564 = vadd.f32 %v1562, %v1563
    %v1565 = vrot.slane %v1558, 4
    %v1566 = vadd.f32 %v1558, %v1565
    %v1567 = vrot.slane %v1566, 2
    %v1568 = vadd.f32 %v1566, %v1567
    %v1569 = vrot.slane %v1568, 1
    %v1570 = vadd.f32 %v1568, %v1569
    %vm1573 = vcmask 1041409
    %v1574 = vsel %vm1573, %v1470, %v1464
    %v1578 = vsel %vm1573, %v1570, %v1564
    %vm1580 = vcmask 7168
    %v1581 = vsel %vm1580, %v1574, %v1578
    %v1582 = vld [vmem:[%s8] sm:$0x1]
    %v1584 = vlaneseq
    %v1585 = vshrl.u32 %v1584, 7
    %v1586 = vsub.s32 0, %v1585
    %v1587 = vrot.slane %v1582, %v1586
    %v1589 = vadd.f32 %v1581, %v1587
    %vm1590 = vcmask 9216
    %1591 = vst.msk [vmem:[#allocation2] sm:$0x3] %vm1590, %v1589
    // Predicated region
    $region38: #{self_attention_forward.1} parent=1 // pred_check
      _
    $region39: #{self_attention_forward.1} parent=1 // pred_check_branch
      %1593 = sbr.rel (0) target = $region41
    $region40: #{self_attention_forward.1} parent=1 // pred_region
      %s1595 = ssub.s32 32, 32
      %1596 = vsyncadd [#allocation3], %s1595
      %s1598 = sshll.u32 [#allocation2], 4
      %s1599 = int_to_ptr.vmem [resolvable:$true] %s1598
      %1601 = dma.vmem_to_hbm [thread:$0]  %s1599, 32, %s9, [#allocation3]
    $region41: #{self_attention_forward.1} parent=1 // pred_fallthru
      _
    // Predicated region
    $region42: #{self_attention_forward.1} parent=1 // pred_check
      _
    $region43: #{self_attention_forward.1} parent=1 // pred_check_branch
      %1603 = sbr.rel (0) target = $region45
    $region44: #{self_attention_forward.1} parent=1 // pred_region
      %1604 = dma.done [#allocation3], 32
    $region45: #{self_attention_forward.1} parent=1 // pred_fallthru
      _
    %1605 = vsyncpa [#allocation3], 1

</llo_original>
